<compile_context>
chip_gen: v5e
topology: v5e:2x2
jax: 0.10.0
libtpu: 0.0.40
codegen_flags: <defaults>
</compile_context>

<pallas_src>
import math
from functools import partial

import jax
import jax.numpy as jnp
from jax.experimental import pallas as pl
from jax.experimental.pallas import tpu as pltpu


# ---------------------------------------------------------------------------
# Pallas kernel: one lane-dense MXU matmul per (scale, image, lane-tile).
# ---------------------------------------------------------------------------
def _conv_matmul_kernel(w_ref, p_ref, o_ref):
    # w_ref: (Cout, K)   bf16  per-output-scale packed weights
    # p_ref: (K, NT)     bf16  im2col patches for one (scale, image) lane tile
    # o_ref: (Cout, NT)  f32   lane-dense output tile (NT = H*W tile, >=128)
    o_ref[...] = jax.lax.dot_general(
        w_ref[...], p_ref[...],
        dimension_numbers=(((1,), (0,)), ((), ())),
        preferred_element_type=jnp.float32,
    ).astype(o_ref.dtype)


def _pick_lane_tile(hw, max_tile=16384):
    """Largest lane tile (multiple of 128) dividing H*W, capped for VMEM."""
    if hw <= max_tile:
        return hw
    for t in range(max_tile, 127, -128):
        if hw % t == 0:
            return t
    return hw  # TODO(synk): irregular H*W falls back to a single whole-image tile


def scale_convert(x_bchw, d):
    """Downscale by integer factor d while keeping the grid size.

    # TODO(synk): `funcs.convert` is not defined in the provided source; it must
    # be element-count preserving (torch reshapes the result back to H, W).
    # Interpreted as average-pool by d + nearest re-upsample.
    """
    if d == 1:
        return x_bchw
    B, C, H, W = x_bchw.shape
    y = x_bchw.reshape(B, C, H // d, d, W // d, d).mean(axis=(3, 5))
    # broadcast + reshape (single fused copy) instead of two jnp.repeat's
    y = jnp.broadcast_to(y[:, :, :, None, :, None], (B, C, H // d, d, W // d, d))
    return y.reshape(B, C, H, W)


# ---------------------------------------------------------------------------
# Fully-jitted forward: glue (scale mix, pad, im2col, transposes) + one
# pallas_call over grid (sout, B, lane_tiles).
# ---------------------------------------------------------------------------
def _dconv2d2_forward(x, weights, bias, *, kernel_scales, kh, kw, sout,
                      downscale, padding):
    if x.ndim == 4:
        x = x[:, None]
    B, C, S, H, W = x.shape
    Cout = weights.shape[0]
    KS = kernel_scales
    ph = pw = padding                       # torch forward hard-codes padding=1
    Ho = H + 2 * ph - kh + 1
    Wo = W + 2 * pw - kw + 1
    HW = Ho * Wo
    K = C * KS * kh * kw

    # ---- scale-space prep (torch does this under no_grad) -----------------
    conv_all = jnp.stack(
        [scale_convert(x[:, :, j], downscale[j]) for j in range(sout)], axis=2
    )                                                       # (B, C, sout, H, W)
    # per output scale s, gather scales s .. s+KS-1 (clipped); out-of-range
    # slots are killed by the zero-padded weights below.
    sk = jnp.arange(sout)[:, None] + jnp.arange(KS)[None, :]           # (sout, KS)
    xg = conv_all[:, :, jnp.minimum(sk, sout - 1)]          # (B, C, sout, KS, H, W)
    xs = jnp.transpose(xg, (2, 0, 1, 3, 4, 5)).reshape(sout, B, C * KS, H, W)

    # ---- im2col: (sout, B, K, Ho*Wo), K ordered as (c, k_scale, dy, dx) ----
    xp = jnp.pad(xs, ((0, 0), (0, 0), (0, 0), (ph, ph), (pw, pw)))
    patches = jnp.stack(
        [xp[..., dy:dy + Ho, dx:dx + Wo] for dy in range(kh) for dx in range(kw)],
        axis=3,
    )                                                       # (sout, B, C*KS, kh*kw, Ho, Wo)
    patches = patches.reshape(sout, B, K, HW).astype(jnp.bfloat16)

    # ---- per-scale zero-padded weights: (sout, Cout, K) --------------------
    wmask = (sk < sout).astype(weights.dtype)                          # (sout, KS)
    wpack = weights[None] * wmask[:, None, None, :, None, None]        # (sout,Cout,C,KS,kh,kw)
    wmat = wpack.reshape(sout, Cout, K).astype(jnp.bfloat16)

    # ---- single fused, pipelined pallas_call -------------------------------
    nt = _pick_lane_tile(HW)
    grid = (sout, B, HW // nt)
    out = pl.pallas_call(
        _conv_matmul_kernel,
        out_shape=jax.ShapeDtypeStruct((sout, B, Cout, HW), jnp.float32),
        grid=grid,
        in_specs=[
            pl.BlockSpec((None, Cout, K), lambda s, b, j: (s, 0, 0)),
            pl.BlockSpec((None, None, K, nt), lambda s, b, j: (s, b, 0, j)),
        ],
        out_specs=pl.BlockSpec((None, None, Cout, nt), lambda s, b, j: (s, b, 0, j)),
        compiler_params=pltpu.CompilerParams(
            dimension_semantics=("parallel", "parallel", "parallel"),
        ),
        cost_estimate=pl.CostEstimate(
            flops=2 * sout * B * Cout * K * HW,
            transcendentals=0,
            bytes_accessed=wmat.size * 2 + patches.size * 2 + sout * B * Cout * HW * 4,
        ),
    )(wmat, patches)

    y = out.reshape(sout, B, Cout, Ho, Wo)
    if bias is not None:
        y = y + bias[None, None, :, None, None]
    return jnp.transpose(y, (1, 2, 0, 3, 4))                # (B, Cout, sout, Ho, Wo)


# ---------------------------------------------------------------------------
# Module wrapper (forward semantics of the torch Dconv2d_2).
# ---------------------------------------------------------------------------
class Dconv2d2:
    def __init__(self, in_channels, out_channels, kernel_size, base, io_scales,
                 stride=1, padding=1, bias=False, pad_mode='constant', *, key):
        self.in_channels = in_channels
        self.out_channels = out_channels
        self.kernel_scales = kernel_size[0]
        self.kernel_size = tuple(kernel_size[1:])
        self.io_scales = list(io_scales)
        self.downscale = tuple(int(base ** i) for i in range(io_scales[1]))
        self.stride = stride
        self.padding = padding
        # TODO(synk): the torch forward hard-codes zero padding=1 in F.conv2d;
        # self.padding / pad_mode are stored but (as in the original) not used.
        self.pad_mode = pad_mode
        assert self.stride == 1, "Pallas forward implements the stride=1 path"

        # reset_parameters(): weights ~ N(0, sqrt(2/n)), bias filled with 1.
        n = self.kernel_size[0] * self.kernel_size[1] * self.kernel_scales * in_channels
        wshape = (out_channels, in_channels, self.kernel_scales,
                  self.kernel_size[0], self.kernel_size[1])
        self.weights = math.sqrt(2.0 / n) * jax.random.normal(key, wshape, jnp.float32)
        self.bias = jnp.ones((out_channels,), jnp.float32) if bias else None

        self._fwd = jax.jit(partial(
            _dconv2d2_forward,
            kernel_scales=self.kernel_scales,
            kh=self.kernel_size[0], kw=self.kernel_size[1],
            sout=self.io_scales[0],
            downscale=self.downscale,
            padding=1,                       # matches the torch forward
        ))

    def __call__(self, x):
        return self._fwd(x, self.weights, self.bias)


# ---------------------------------------------------------------------------
# Pure-JAX f32 reference (mirrors the per-scale torch loop) for a sanity check.
# ---------------------------------------------------------------------------
def _reference_forward(model, x):
    B, C, S, H, W = x.shape
    sout = model.io_scales[0]
    kh, kw = model.kernel_size
    outs = []
    for s in range(sout):
        t = min(s + model.kernel_scales, sout)
        slabs = [scale_convert(x[:, :, k], model.downscale[k]) for k in range(s, t)]
        xs = jnp.stack(slabs, axis=2).reshape(B, C * (t - s), H, W)
        w = model.weights[:, :, :t - s].reshape(model.out_channels, C * (t - s), kh, kw)
        y = jax.lax.conv_general_dilated(
            xs, w, window_strides=(1, 1), padding=((1, 1), (1, 1)),
            dimension_numbers=('NCHW', 'OIHW', 'NCHW'))
        if model.bias is not None:
            y = y + model.bias[None, :, None, None]
        outs.append(y)
    return jnp.stack(outs, axis=2)


if __name__ == "__main__":
    key = jax.random.PRNGKey(0)
    k_w, k_x = jax.random.split(key)

    B, Cin, Cout = 2, 4, 8
    S, H, W = 3, 16, 16
    model = Dconv2d2(in_channels=Cin, out_channels=Cout, kernel_size=(2, 3, 3),
                     base=2, io_scales=[S, S], stride=1, padding=1, bias=False,
                     key=k_w)

    x = jax.random.normal(k_x, (B, Cin, S, H, W), jnp.float32)
    out = jax.block_until_ready(model(x))

    assert out.shape == (B, Cout, S, H, W), out.shape
    assert bool(jnp.all(jnp.isfinite(out)))

    # numerical sanity check vs. a pure-JAX f32 conv (bf16 operands -> loose tol)
    ref = _reference_forward(model, x)
    max_err = float(jnp.max(jnp.abs(out - ref)))
    assert max_err < 1e-1, f"mismatch vs reference: {max_err}"

    print("KERNEL_OK")
</pallas_src>

<mosaic_0001>
module attributes {stable_mosaic.version = 11 : i64} {
  func.func @_conv_matmul_kernel(%arg0: i32, %arg1: i32, %arg2: i32, %arg3: memref<1x8x72xbf16, #tpu.memory_space<vmem>>, %arg4: memref<1x1x72x256xbf16, #tpu.memory_space<vmem>>, %arg5: memref<1x1x8x256xf32, #tpu.memory_space<vmem>>) attributes {dimension_semantics = [#tpu.dimension_semantics<parallel>, #tpu.dimension_semantics<parallel>, #tpu.dimension_semantics<parallel>], iteration_bounds = array<i64: 3, 2, 1>, scalar_prefetch = 0 : i64, scratch_operands = 0 : i64, tpu.core_type = #tpu.core_type<tc>, window_params = [{transform_indices = @transform_0, window_bounds = array<i64: 1, 8, 72>}, {transform_indices = @transform_1, window_bounds = array<i64: 1, 1, 72, 256>}, {transform_indices = @transform_2, window_bounds = array<i64: 1, 1, 8, 256>}]} {
    %c0 = arith.constant 0 : index
    %c0_0 = arith.constant 0 : index
    %c0_1 = arith.constant 0 : index
    %0 = vector.load %arg3[%c0, %c0_0, %c0_1] : memref<1x8x72xbf16, #tpu.memory_space<vmem>>, vector<1x8x72xbf16>
    %1 = vector.shape_cast %0 : vector<1x8x72xbf16> to vector<8x72xbf16>
    %c0_2 = arith.constant 0 : index
    %c0_3 = arith.constant 0 : index
    %c0_4 = arith.constant 0 : index
    %c0_5 = arith.constant 0 : index
    %2 = vector.load %arg4[%c0_2, %c0_3, %c0_4, %c0_5] : memref<1x1x72x256xbf16, #tpu.memory_space<vmem>>, vector<1x1x72x256xbf16>
    %3 = vector.shape_cast %2 : vector<1x1x72x256xbf16> to vector<72x256xbf16>
    %cst = arith.constant dense<0.000000e+00> : vector<8x256xf32>
    %4 = tpu.matmul %1, %3, %cst {dimension_numbers = #tpu.dot_dimension_numbers<[1], [0], [0], [1], [0, 0, 1, 1], [], []>} : vector<8x72xbf16>, vector<72x256xbf16>, vector<8x256xf32> -> vector<8x256xf32>
    %c0_6 = arith.constant 0 : index
    %c0_7 = arith.constant 0 : index
    %c0_8 = arith.constant 0 : index
    %c0_9 = arith.constant 0 : index
    %5 = vector.load %arg5[%c0_6, %c0_7, %c0_8, %c0_9] : memref<1x1x8x256xf32, #tpu.memory_space<vmem>>, vector<1x1x8x256xf32>
    %6 = vector.shape_cast %5 : vector<1x1x8x256xf32> to vector<8x256xf32>
    %7 = vector.shape_cast %4 : vector<8x256xf32> to vector<1x1x8x256xf32>
    tpu.vector_store %arg5[%c0_6, %c0_7, %c0_8, %c0_9], %7 {strides = array<i32>} : memref<1x1x8x256xf32, #tpu.memory_space<vmem>>, vector<1x1x8x256xf32>,
    return
  }
  func.func @transform_0(%arg0: i32, %arg1: i32, %arg2: i32) -> (i32, i32, i32) {
    %c0_i32 = arith.constant 0 : i32
    %c0_i32_0 = arith.constant 0 : i32
    %c0_i32_1 = arith.constant 0 : i32
    return %arg0, %c0_i32, %c0_i32_0 : i32, i32, i32
  }
  func.func @transform_1(%arg0: i32, %arg1: i32, %arg2: i32) -> (i32, i32, i32, i32) {
    %c0_i32 = arith.constant 0 : i32
    %c0_i32_0 = arith.constant 0 : i32
    return %arg0, %arg1, %c0_i32, %arg2 : i32, i32, i32, i32
  }
  func.func @transform_2(%arg0: i32, %arg1: i32, %arg2: i32) -> (i32, i32, i32, i32) {
    %c0_i32 = arith.constant 0 : i32
    %c0_i32_0 = arith.constant 0 : i32
    return %arg0, %arg1, %c0_i32, %arg2 : i32, i32, i32, i32
  }
}

</mosaic_0001>

<llo_original>
// kernel: squeeze.3
$region0: #{squeeze.3}
  %s0 = inlined_call_operand.vmem [shape: f32[2,4,1,16,16], index: 0, kind: input, shape index: {}]
  %s1 = inlined_call_operand.vmem [shape: f32[2,4,4,4,4,4], index: 1, kind: output, shape index: {}]
  $region1: #{squeeze.3} parent=0
    #allocation0 [shape = 'u8[524288]{0}', space=vmem, size = 0x80000, scoped, tag = 'scoped mem for output reshape']
    %v2 = vld [vmem:[%s0] sm:$0xff]
    %vm3 = vcmask 31744
    %4 = vst.msk [vmem:[#allocation0] ss:$8 sm:$0xf] %vm3, %v2
    %5 = vst.msk [vmem:[#allocation0] ss:$8 sm:$0xf0] %vm3, %v2
    %s6 = scalar_lea.vmem %s0, 8
    %v7 = vld [vmem:[%s6] sm:$0xff]
    %vm8 = vcmask 31744
    %s9 = scalar_lea.vmem [#allocation0], 64
    %10 = vst.msk [vmem:[%s9] ss:$8 sm:$0xf] %vm8, %v7
    %s11 = scalar_lea.vmem [#allocation0], 64
    %12 = vst.msk [vmem:[%s11] ss:$8 sm:$0xf0] %vm8, %v7
    %s13 = scalar_lea.vmem %s0, 16
    %v14 = vld [vmem:[%s13] sm:$0xff]
    %vm15 = vcmask 31744
    %s16 = scalar_lea.vmem [#allocation0], 128
    %17 = vst.msk [vmem:[%s16] ss:$8 sm:$0xf] %vm15, %v14
    %s18 = scalar_lea.vmem [#allocation0], 128
    %19 = vst.msk [vmem:[%s18] ss:$8 sm:$0xf0] %vm15, %v14
    %s20 = scalar_lea.vmem %s0, 24
    %v21 = vld [vmem:[%s20] sm:$0xff]
    %vm22 = vcmask 31744
    %s23 = scalar_lea.vmem [#allocation0], 192
    %24 = vst.msk [vmem:[%s23] ss:$8 sm:$0xf] %vm22, %v21
    %s25 = scalar_lea.vmem [#allocation0], 192
    %26 = vst.msk [vmem:[%s25] ss:$8 sm:$0xf0] %vm22, %v21
    %s27 = scalar_lea.vmem %s0, 32
    %v28 = vld [vmem:[%s27] sm:$0xff]
    %vm29 = vcmask 31744
    %s30 = scalar_lea.vmem [#allocation0], 256
    %31 = vst.msk [vmem:[%s30] ss:$8 sm:$0xf] %vm29, %v28
    %s32 = scalar_lea.vmem [#allocation0], 256
    %33 = vst.msk [vmem:[%s32] ss:$8 sm:$0xf0] %vm29, %v28
    %s34 = scalar_lea.vmem %s0, 40
    %v35 = vld [vmem:[%s34] sm:$0xff]
    %vm36 = vcmask 31744
    %s37 = scalar_lea.vmem [#allocation0], 320
    %38 = vst.msk [vmem:[%s37] ss:$8 sm:$0xf] %vm36, %v35
    %s39 = scalar_lea.vmem [#allocation0], 320
    %40 = vst.msk [vmem:[%s39] ss:$8 sm:$0xf0] %vm36, %v35
    %s41 = scalar_lea.vmem %s0, 48
    %v42 = vld [vmem:[%s41] sm:$0xff]
    %vm43 = vcmask 31744
    %s44 = scalar_lea.vmem [#allocation0], 384
    %45 = vst.msk [vmem:[%s44] ss:$8 sm:$0xf] %vm43, %v42
    %s46 = scalar_lea.vmem [#allocation0], 384
    %47 = vst.msk [vmem:[%s46] ss:$8 sm:$0xf0] %vm43, %v42
    %s48 = scalar_lea.vmem %s0, 56
    %v49 = vld [vmem:[%s48] sm:$0xff]
    %vm50 = vcmask 31744
    %s51 = scalar_lea.vmem [#allocation0], 448
    %52 = vst.msk [vmem:[%s51] ss:$8 sm:$0xf] %vm50, %v49
    %s53 = scalar_lea.vmem [#allocation0], 448
    %54 = vst.msk [vmem:[%s53] ss:$8 sm:$0xf0] %vm50, %v49
    %s55 = scalar_lea.vmem %s0, 64
    %v56 = vld [vmem:[%s55] sm:$0xff]
    %vm57 = vcmask 31744
    %s58 = scalar_lea.vmem [#allocation0], 512
    %59 = vst.msk [vmem:[%s58] ss:$8 sm:$0xf] %vm57, %v56
    %s60 = scalar_lea.vmem [#allocation0], 512
    %61 = vst.msk [vmem:[%s60] ss:$8 sm:$0xf0] %vm57, %v56
    %s62 = scalar_lea.vmem %s0, 72
    %v63 = vld [vmem:[%s62] sm:$0xff]
    %vm64 = vcmask 31744
    %s65 = scalar_lea.vmem [#allocation0], 576
    %66 = vst.msk [vmem:[%s65] ss:$8 sm:$0xf] %vm64, %v63
    %s67 = scalar_lea.vmem [#allocation0], 576
    %68 = vst.msk [vmem:[%s67] ss:$8 sm:$0xf0] %vm64, %v63
    %s69 = scalar_lea.vmem %s0, 80
    %v70 = vld [vmem:[%s69] sm:$0xff]
    %vm71 = vcmask 31744
    %s72 = scalar_lea.vmem [#allocation0], 640
    %73 = vst.msk [vmem:[%s72] ss:$8 sm:$0xf] %vm71, %v70
    %s74 = scalar_lea.vmem [#allocation0], 640
    %75 = vst.msk [vmem:[%s74] ss:$8 sm:$0xf0] %vm71, %v70
    %s76 = scalar_lea.vmem %s0, 88
    %v77 = vld [vmem:[%s76] sm:$0xff]
    %vm78 = vcmask 31744
    %s79 = scalar_lea.vmem [#allocation0], 704
    %80 = vst.msk [vmem:[%s79] ss:$8 sm:$0xf] %vm78, %v77
    %s81 = scalar_lea.vmem [#allocation0], 704
    %82 = vst.msk [vmem:[%s81] ss:$8 sm:$0xf0] %vm78, %v77
    %s83 = scalar_lea.vmem %s0, 96
    %v84 = vld [vmem:[%s83] sm:$0xff]
    %vm85 = vcmask 31744
    %s86 = scalar_lea.vmem [#allocation0], 768
    %87 = vst.msk [vmem:[%s86] ss:$8 sm:$0xf] %vm85, %v84
    %s88 = scalar_lea.vmem [#allocation0], 768
    %89 = vst.msk [vmem:[%s88] ss:$8 sm:$0xf0] %vm85, %v84
    %s90 = scalar_lea.vmem %s0, 104
    %v91 = vld [vmem:[%s90] sm:$0xff]
    %vm92 = vcmask 31744
    %s93 = scalar_lea.vmem [#allocation0], 832
    %94 = vst.msk [vmem:[%s93] ss:$8 sm:$0xf] %vm92, %v91
    %s95 = scalar_lea.vmem [#allocation0], 832
    %96 = vst.msk [vmem:[%s95] ss:$8 sm:$0xf0] %vm92, %v91
    %s97 = scalar_lea.vmem %s0, 112
    %v98 = vld [vmem:[%s97] sm:$0xff]
    %vm99 = vcmask 31744
    %s100 = scalar_lea.vmem [#allocation0], 896
    %101 = vst.msk [vmem:[%s100] ss:$8 sm:$0xf] %vm99, %v98
    %s102 = scalar_lea.vmem [#allocation0], 896
    %103 = vst.msk [vmem:[%s102] ss:$8 sm:$0xf0] %vm99, %v98
    %s104 = scalar_lea.vmem %s0, 120
    %v105 = vld [vmem:[%s104] sm:$0xff]
    %vm106 = vcmask 31744
    %s107 = scalar_lea.vmem [#allocation0], 960
    %108 = vst.msk [vmem:[%s107] ss:$8 sm:$0xf] %vm106, %v105
    %s109 = scalar_lea.vmem [#allocation0], 960
    %110 = vst.msk [vmem:[%s109] ss:$8 sm:$0xf0] %vm106, %v105
    %v111 = vld [vmem:[%s0] sm:$0xff]
    %112 = vrot.lane.b32.xlu0 %v111, 124
    %v113 = vpop.permute.xlu0 %112
    %vm114 = vcmask 31744
    %s115 = scalar_lea.vmem [#allocation0], 1
    %116 = vst.msk [vmem:[%s115] ss:$8 sm:$0xf] %vm114, %v113
    %s117 = scalar_lea.vmem [#allocation0], 1
    %118 = vst.msk [vmem:[%s117] ss:$8 sm:$0xf0] %vm114, %v113
    %s119 = scalar_lea.vmem %s0, 8
    %v120 = vld [vmem:[%s119] sm:$0xff]
    %121 = vrot.lane.b32.xlu0 %v120, 124
    %v122 = vpop.permute.xlu0 %121
    %vm123 = vcmask 31744
    %s124 = scalar_lea.vmem [#allocation0], 65
    %125 = vst.msk [vmem:[%s124] ss:$8 sm:$0xf] %vm123, %v122
    %s126 = scalar_lea.vmem [#allocation0], 65
    %127 = vst.msk [vmem:[%s126] ss:$8 sm:$0xf0] %vm123, %v122
    %s128 = scalar_lea.vmem %s0, 16
    %v129 = vld [vmem:[%s128] sm:$0xff]
    %130 = vrot.lane.b32.xlu0 %v129, 124
    %v131 = vpop.permute.xlu0 %130
    %vm132 = vcmask 31744
    %s133 = scalar_lea.vmem [#allocation0], 129
    %134 = vst.msk [vmem:[%s133] ss:$8 sm:$0xf] %vm132, %v131
    %s135 = scalar_lea.vmem [#allocation0], 129
    %136 = vst.msk [vmem:[%s135] ss:$8 sm:$0xf0] %vm132, %v131
    %s137 = scalar_lea.vmem %s0, 24
    %v138 = vld [vmem:[%s137] sm:$0xff]
    %139 = vrot.lane.b32.xlu0 %v138, 124
    %v140 = vpop.permute.xlu0 %139
    %vm141 = vcmask 31744
    %s142 = scalar_lea.vmem [#allocation0], 193
    %143 = vst.msk [vmem:[%s142] ss:$8 sm:$0xf] %vm141, %v140
    %s144 = scalar_lea.vmem [#allocation0], 193
    %145 = vst.msk [vmem:[%s144] ss:$8 sm:$0xf0] %vm141, %v140
    %s146 = scalar_lea.vmem %s0, 32
    %v147 = vld [vmem:[%s146] sm:$0xff]
    %148 = vrot.lane.b32.xlu0 %v147, 124
    %v149 = vpop.permute.xlu0 %148
    %vm150 = vcmask 31744
    %s151 = scalar_lea.vmem [#allocation0], 257
    %152 = vst.msk [vmem:[%s151] ss:$8 sm:$0xf] %vm150, %v149
    %s153 = scalar_lea.vmem [#allocation0], 257
    %154 = vst.msk [vmem:[%s153] ss:$8 sm:$0xf0] %vm150, %v149
    %s155 = scalar_lea.vmem %s0, 40
    %v156 = vld [vmem:[%s155] sm:$0xff]
    %157 = vrot.lane.b32.xlu0 %v156, 124
    %v158 = vpop.permute.xlu0 %157
    %vm159 = vcmask 31744
    %s160 = scalar_lea.vmem [#allocation0], 321
    %161 = vst.msk [vmem:[%s160] ss:$8 sm:$0xf] %vm159, %v158
    %s162 = scalar_lea.vmem [#allocation0], 321
    %163 = vst.msk [vmem:[%s162] ss:$8 sm:$0xf0] %vm159, %v158
    %s164 = scalar_lea.vmem %s0, 48
    %v165 = vld [vmem:[%s164] sm:$0xff]
    %166 = vrot.lane.b32.xlu0 %v165, 124
    %v167 = vpop.permute.xlu0 %166
    %vm168 = vcmask 31744
    %s169 = scalar_lea.vmem [#allocation0], 385
    %170 = vst.msk [vmem:[%s169] ss:$8 sm:$0xf] %vm168, %v167
    %s171 = scalar_lea.vmem [#allocation0], 385
    %172 = vst.msk [vmem:[%s171] ss:$8 sm:$0xf0] %vm168, %v167
    %s173 = scalar_lea.vmem %s0, 56
    %v174 = vld [vmem:[%s173] sm:$0xff]
    %175 = vrot.lane.b32.xlu0 %v174, 124
    %v176 = vpop.permute.xlu0 %175
    %vm177 = vcmask 31744
    %s178 = scalar_lea.vmem [#allocation0], 449
    %179 = vst.msk [vmem:[%s178] ss:$8 sm:$0xf] %vm177, %v176
    %s180 = scalar_lea.vmem [#allocation0], 449
    %181 = vst.msk [vmem:[%s180] ss:$8 sm:$0xf0] %vm177, %v176
    %s182 = scalar_lea.vmem %s0, 64
    %v183 = vld [vmem:[%s182] sm:$0xff]
    %184 = vrot.lane.b32.xlu0 %v183, 124
    %v185 = vpop.permute.xlu0 %184
    %vm186 = vcmask 31744
    %s187 = scalar_lea.vmem [#allocation0], 513
    %188 = vst.msk [vmem:[%s187] ss:$8 sm:$0xf] %vm186, %v185
    %s189 = scalar_lea.vmem [#allocation0], 513
    %190 = vst.msk [vmem:[%s189] ss:$8 sm:$0xf0] %vm186, %v185
    %s191 = scalar_lea.vmem %s0, 72
    %v192 = vld [vmem:[%s191] sm:$0xff]
    %193 = vrot.lane.b32.xlu0 %v192, 124
    %v194 = vpop.permute.xlu0 %193
    %vm195 = vcmask 31744
    %s196 = scalar_lea.vmem [#allocation0], 577
    %197 = vst.msk [vmem:[%s196] ss:$8 sm:$0xf] %vm195, %v194
    %s198 = scalar_lea.vmem [#allocation0], 577
    %199 = vst.msk [vmem:[%s198] ss:$8 sm:$0xf0] %vm195, %v194
    %s200 = scalar_lea.vmem %s0, 80
    %v201 = vld [vmem:[%s200] sm:$0xff]
    %202 = vrot.lane.b32.xlu0 %v201, 124
    %v203 = vpop.permute.xlu0 %202
    %vm204 = vcmask 31744
    %s205 = scalar_lea.vmem [#allocation0], 641
    %206 = vst.msk [vmem:[%s205] ss:$8 sm:$0xf] %vm204, %v203
    %s207 = scalar_lea.vmem [#allocation0], 641
    %208 = vst.msk [vmem:[%s207] ss:$8 sm:$0xf0] %vm204, %v203
    %s209 = scalar_lea.vmem %s0, 88
    %v210 = vld [vmem:[%s209] sm:$0xff]
    %211 = vrot.lane.b32.xlu0 %v210, 124
    %v212 = vpop.permute.xlu0 %211
    %vm213 = vcmask 31744
    %s214 = scalar_lea.vmem [#allocation0], 705
    %215 = vst.msk [vmem:[%s214] ss:$8 sm:$0xf] %vm213, %v212
    %s216 = scalar_lea.vmem [#allocation0], 705
    %217 = vst.msk [vmem:[%s216] ss:$8 sm:$0xf0] %vm213, %v212
    %s218 = scalar_lea.vmem %s0, 96
    %v219 = vld [vmem:[%s218] sm:$0xff]
    %220 = vrot.lane.b32.xlu0 %v219, 124
    %v221 = vpop.permute.xlu0 %220
    %vm222 = vcmask 31744
    %s223 = scalar_lea.vmem [#allocation0], 769
    %224 = vst.msk [vmem:[%s223] ss:$8 sm:$0xf] %vm222, %v221
    %s225 = scalar_lea.vmem [#allocation0], 769
    %226 = vst.msk [vmem:[%s225] ss:$8 sm:$0xf0] %vm222, %v221
    %s227 = scalar_lea.vmem %s0, 104
    %v228 = vld [vmem:[%s227] sm:$0xff]
    %229 = vrot.lane.b32.xlu0 %v228, 124
    %v230 = vpop.permute.xlu0 %229
    %vm231 = vcmask 31744
    %s232 = scalar_lea.vmem [#allocation0], 833
    %233 = vst.msk [vmem:[%s232] ss:$8 sm:$0xf] %vm231, %v230
    %s234 = scalar_lea.vmem [#allocation0], 833
    %235 = vst.msk [vmem:[%s234] ss:$8 sm:$0xf0] %vm231, %v230
    %s236 = scalar_lea.vmem %s0, 112
    %v237 = vld [vmem:[%s236] sm:$0xff]
    %238 = vrot.lane.b32.xlu0 %v237, 124
    %v239 = vpop.permute.xlu0 %238
    %vm240 = vcmask 31744
    %s241 = scalar_lea.vmem [#allocation0], 897
    %242 = vst.msk [vmem:[%s241] ss:$8 sm:$0xf] %vm240, %v239
    %s243 = scalar_lea.vmem [#allocation0], 897
    %244 = vst.msk [vmem:[%s243] ss:$8 sm:$0xf0] %vm240, %v239
    %s245 = scalar_lea.vmem %s0, 120
    %v246 = vld [vmem:[%s245] sm:$0xff]
    %247 = vrot.lane.b32.xlu0 %v246, 124
    %v248 = vpop.permute.xlu0 %247
    %vm249 = vcmask 31744
    %s250 = scalar_lea.vmem [#allocation0], 961
    %251 = vst.msk [vmem:[%s250] ss:$8 sm:$0xf] %vm249, %v248
    %s252 = scalar_lea.vmem [#allocation0], 961
    %253 = vst.msk [vmem:[%s252] ss:$8 sm:$0xf0] %vm249, %v248
    %v254 = vld [vmem:[%s0] sm:$0xff]
    %255 = vrot.lane.b32.xlu0 %v254, 120
    %v256 = vpop.permute.xlu0 %255
    %vm257 = vcmask 31744
    %s258 = scalar_lea.vmem [#allocation0], 2
    %259 = vst.msk [vmem:[%s258] ss:$8 sm:$0xf] %vm257, %v256
    %s260 = scalar_lea.vmem [#allocation0], 2
    %261 = vst.msk [vmem:[%s260] ss:$8 sm:$0xf0] %vm257, %v256
    %s262 = scalar_lea.vmem %s0, 8
    %v263 = vld [vmem:[%s262] sm:$0xff]
    %264 = vrot.lane.b32.xlu0 %v263, 120
    %v265 = vpop.permute.xlu0 %264
    %vm266 = vcmask 31744
    %s267 = scalar_lea.vmem [#allocation0], 66
    %268 = vst.msk [vmem:[%s267] ss:$8 sm:$0xf] %vm266, %v265
    %s269 = scalar_lea.vmem [#allocation0], 66
    %270 = vst.msk [vmem:[%s269] ss:$8 sm:$0xf0] %vm266, %v265
    %s271 = scalar_lea.vmem %s0, 16
    %v272 = vld [vmem:[%s271] sm:$0xff]
    %273 = vrot.lane.b32.xlu0 %v272, 120
    %v274 = vpop.permute.xlu0 %273
    %vm275 = vcmask 31744
    %s276 = scalar_lea.vmem [#allocation0], 130
    %277 = vst.msk [vmem:[%s276] ss:$8 sm:$0xf] %vm275, %v274
    %s278 = scalar_lea.vmem [#allocation0], 130
    %279 = vst.msk [vmem:[%s278] ss:$8 sm:$0xf0] %vm275, %v274
    %s280 = scalar_lea.vmem %s0, 24
    %v281 = vld [vmem:[%s280] sm:$0xff]
    %282 = vrot.lane.b32.xlu0 %v281, 120
    %v283 = vpop.permute.xlu0 %282
    %vm284 = vcmask 31744
    %s285 = scalar_lea.vmem [#allocation0], 194
    %286 = vst.msk [vmem:[%s285] ss:$8 sm:$0xf] %vm284, %v283
    %s287 = scalar_lea.vmem [#allocation0], 194
    %288 = vst.msk [vmem:[%s287] ss:$8 sm:$0xf0] %vm284, %v283
    %s289 = scalar_lea.vmem %s0, 32
    %v290 = vld [vmem:[%s289] sm:$0xff]
    %291 = vrot.lane.b32.xlu0 %v290, 120
    %v292 = vpop.permute.xlu0 %291
    %vm293 = vcmask 31744
    %s294 = scalar_lea.vmem [#allocation0], 258
    %295 = vst.msk [vmem:[%s294] ss:$8 sm:$0xf] %vm293, %v292
    %s296 = scalar_lea.vmem [#allocation0], 258
    %297 = vst.msk [vmem:[%s296] ss:$8 sm:$0xf0] %vm293, %v292
    %s298 = scalar_lea.vmem %s0, 40
    %v299 = vld [vmem:[%s298] sm:$0xff]
    %300 = vrot.lane.b32.xlu0 %v299, 120
    %v301 = vpop.permute.xlu0 %300
    %vm302 = vcmask 31744
    %s303 = scalar_lea.vmem [#allocation0], 322
    %304 = vst.msk [vmem:[%s303] ss:$8 sm:$0xf] %vm302, %v301
    %s305 = scalar_lea.vmem [#allocation0], 322
    %306 = vst.msk [vmem:[%s305] ss:$8 sm:$0xf0] %vm302, %v301
    %s307 = scalar_lea.vmem %s0, 48
    %v308 = vld [vmem:[%s307] sm:$0xff]
    %309 = vrot.lane.b32.xlu0 %v308, 120
    %v310 = vpop.permute.xlu0 %309
    %vm311 = vcmask 31744
    %s312 = scalar_lea.vmem [#allocation0], 386
    %313 = vst.msk [vmem:[%s312] ss:$8 sm:$0xf] %vm311, %v310
    %s314 = scalar_lea.vmem [#allocation0], 386
    %315 = vst.msk [vmem:[%s314] ss:$8 sm:$0xf0] %vm311, %v310
    %s316 = scalar_lea.vmem %s0, 56
    %v317 = vld [vmem:[%s316] sm:$0xff]
    %318 = vrot.lane.b32.xlu0 %v317, 120
    %v319 = vpop.permute.xlu0 %318
    %vm320 = vcmask 31744
    %s321 = scalar_lea.vmem [#allocation0], 450
    %322 = vst.msk [vmem:[%s321] ss:$8 sm:$0xf] %vm320, %v319
    %s323 = scalar_lea.vmem [#allocation0], 450
    %324 = vst.msk [vmem:[%s323] ss:$8 sm:$0xf0] %vm320, %v319
    %s325 = scalar_lea.vmem %s0, 64
    %v326 = vld [vmem:[%s325] sm:$0xff]
    %327 = vrot.lane.b32.xlu0 %v326, 120
    %v328 = vpop.permute.xlu0 %327
    %vm329 = vcmask 31744
    %s330 = scalar_lea.vmem [#allocation0], 514
    %331 = vst.msk [vmem:[%s330] ss:$8 sm:$0xf] %vm329, %v328
    %s332 = scalar_lea.vmem [#allocation0], 514
    %333 = vst.msk [vmem:[%s332] ss:$8 sm:$0xf0] %vm329, %v328
    %s334 = scalar_lea.vmem %s0, 72
    %v335 = vld [vmem:[%s334] sm:$0xff]
    %336 = vrot.lane.b32.xlu0 %v335, 120
    %v337 = vpop.permute.xlu0 %336
    %vm338 = vcmask 31744
    %s339 = scalar_lea.vmem [#allocation0], 578
    %340 = vst.msk [vmem:[%s339] ss:$8 sm:$0xf] %vm338, %v337
    %s341 = scalar_lea.vmem [#allocation0], 578
    %342 = vst.msk [vmem:[%s341] ss:$8 sm:$0xf0] %vm338, %v337
    %s343 = scalar_lea.vmem %s0, 80
    %v344 = vld [vmem:[%s343] sm:$0xff]
    %345 = vrot.lane.b32.xlu0 %v344, 120
    %v346 = vpop.permute.xlu0 %345
    %vm347 = vcmask 31744
    %s348 = scalar_lea.vmem [#allocation0], 642
    %349 = vst.msk [vmem:[%s348] ss:$8 sm:$0xf] %vm347, %v346
    %s350 = scalar_lea.vmem [#allocation0], 642
    %351 = vst.msk [vmem:[%s350] ss:$8 sm:$0xf0] %vm347, %v346
    %s352 = scalar_lea.vmem %s0, 88
    %v353 = vld [vmem:[%s352] sm:$0xff]
    %354 = vrot.lane.b32.xlu0 %v353, 120
    %v355 = vpop.permute.xlu0 %354
    %vm356 = vcmask 31744
    %s357 = scalar_lea.vmem [#allocation0], 706
    %358 = vst.msk [vmem:[%s357] ss:$8 sm:$0xf] %vm356, %v355
    %s359 = scalar_lea.vmem [#allocation0], 706
    %360 = vst.msk [vmem:[%s359] ss:$8 sm:$0xf0] %vm356, %v355
    %s361 = scalar_lea.vmem %s0, 96
    %v362 = vld [vmem:[%s361] sm:$0xff]
    %363 = vrot.lane.b32.xlu0 %v362, 120
    %v364 = vpop.permute.xlu0 %363
    %vm365 = vcmask 31744
    %s366 = scalar_lea.vmem [#allocation0], 770
    %367 = vst.msk [vmem:[%s366] ss:$8 sm:$0xf] %vm365, %v364
    %s368 = scalar_lea.vmem [#allocation0], 770
    %369 = vst.msk [vmem:[%s368] ss:$8 sm:$0xf0] %vm365, %v364
    %s370 = scalar_lea.vmem %s0, 104
    %v371 = vld [vmem:[%s370] sm:$0xff]
    %372 = vrot.lane.b32.xlu0 %v371, 120
    %v373 = vpop.permute.xlu0 %372
    %vm374 = vcmask 31744
    %s375 = scalar_lea.vmem [#allocation0], 834
    %376 = vst.msk [vmem:[%s375] ss:$8 sm:$0xf] %vm374, %v373
    %s377 = scalar_lea.vmem [#allocation0], 834
    %378 = vst.msk [vmem:[%s377] ss:$8 sm:$0xf0] %vm374, %v373
    %s379 = scalar_lea.vmem %s0, 112
    %v380 = vld [vmem:[%s379] sm:$0xff]
    %381 = vrot.lane.b32.xlu0 %v380, 120
    %v382 = vpop.permute.xlu0 %381
    %vm383 = vcmask 31744
    %s384 = scalar_lea.vmem [#allocation0], 898
    %385 = vst.msk [vmem:[%s384] ss:$8 sm:$0xf] %vm383, %v382
    %s386 = scalar_lea.vmem [#allocation0], 898
    %387 = vst.msk [vmem:[%s386] ss:$8 sm:$0xf0] %vm383, %v382
    %s388 = scalar_lea.vmem %s0, 120
    %v389 = vld [vmem:[%s388] sm:$0xff]
    %390 = vrot.lane.b32.xlu0 %v389, 120
    %v391 = vpop.permute.xlu0 %390
    %vm392 = vcmask 31744
    %s393 = scalar_lea.vmem [#allocation0], 962
    %394 = vst.msk [vmem:[%s393] ss:$8 sm:$0xf] %vm392, %v391
    %s395 = scalar_lea.vmem [#allocation0], 962
    %396 = vst.msk [vmem:[%s395] ss:$8 sm:$0xf0] %vm392, %v391
    %v397 = vld [vmem:[%s0] sm:$0xff]
    %398 = vrot.lane.b32.xlu0 %v397, 116
    %v399 = vpop.permute.xlu0 %398
    %vm400 = vcmask 31744
    %s401 = scalar_lea.vmem [#allocation0], 3
    %402 = vst.msk [vmem:[%s401] ss:$8 sm:$0xf] %vm400, %v399
    %s403 = scalar_lea.vmem [#allocation0], 3
    %404 = vst.msk [vmem:[%s403] ss:$8 sm:$0xf0] %vm400, %v399
    %s405 = scalar_lea.vmem %s0, 8
    %v406 = vld [vmem:[%s405] sm:$0xff]
    %407 = vrot.lane.b32.xlu0 %v406, 116
    %v408 = vpop.permute.xlu0 %407
    %vm409 = vcmask 31744
    %s410 = scalar_lea.vmem [#allocation0], 67
    %411 = vst.msk [vmem:[%s410] ss:$8 sm:$0xf] %vm409, %v408
    %s412 = scalar_lea.vmem [#allocation0], 67
    %413 = vst.msk [vmem:[%s412] ss:$8 sm:$0xf0] %vm409, %v408
    %s414 = scalar_lea.vmem %s0, 16
    %v415 = vld [vmem:[%s414] sm:$0xff]
    %416 = vrot.lane.b32.xlu0 %v415, 116
    %v417 = vpop.permute.xlu0 %416
    %vm418 = vcmask 31744
    %s419 = scalar_lea.vmem [#allocation0], 131
    %420 = vst.msk [vmem:[%s419] ss:$8 sm:$0xf] %vm418, %v417
    %s421 = scalar_lea.vmem [#allocation0], 131
    %422 = vst.msk [vmem:[%s421] ss:$8 sm:$0xf0] %vm418, %v417
    %s423 = scalar_lea.vmem %s0, 24
    %v424 = vld [vmem:[%s423] sm:$0xff]
    %425 = vrot.lane.b32.xlu0 %v424, 116
    %v426 = vpop.permute.xlu0 %425
    %vm427 = vcmask 31744
    %s428 = scalar_lea.vmem [#allocation0], 195
    %429 = vst.msk [vmem:[%s428] ss:$8 sm:$0xf] %vm427, %v426
    %s430 = scalar_lea.vmem [#allocation0], 195
    %431 = vst.msk [vmem:[%s430] ss:$8 sm:$0xf0] %vm427, %v426
    %s432 = scalar_lea.vmem %s0, 32
    %v433 = vld [vmem:[%s432] sm:$0xff]
    %434 = vrot.lane.b32.xlu0 %v433, 116
    %v435 = vpop.permute.xlu0 %434
    %vm436 = vcmask 31744
    %s437 = scalar_lea.vmem [#allocation0], 259
    %438 = vst.msk [vmem:[%s437] ss:$8 sm:$0xf] %vm436, %v435
    %s439 = scalar_lea.vmem [#allocation0], 259
    %440 = vst.msk [vmem:[%s439] ss:$8 sm:$0xf0] %vm436, %v435
    %s441 = scalar_lea.vmem %s0, 40
    %v442 = vld [vmem:[%s441] sm:$0xff]
    %443 = vrot.lane.b32.xlu0 %v442, 116
    %v444 = vpop.permute.xlu0 %443
    %vm445 = vcmask 31744
    %s446 = scalar_lea.vmem [#allocation0], 323
    %447 = vst.msk [vmem:[%s446] ss:$8 sm:$0xf] %vm445, %v444
    %s448 = scalar_lea.vmem [#allocation0], 323
    %449 = vst.msk [vmem:[%s448] ss:$8 sm:$0xf0] %vm445, %v444
    %s450 = scalar_lea.vmem %s0, 48
    %v451 = vld [vmem:[%s450] sm:$0xff]
    %452 = vrot.lane.b32.xlu0 %v451, 116
    %v453 = vpop.permute.xlu0 %452
    %vm454 = vcmask 31744
    %s455 = scalar_lea.vmem [#allocation0], 387
    %456 = vst.msk [vmem:[%s455] ss:$8 sm:$0xf] %vm454, %v453
    %s457 = scalar_lea.vmem [#allocation0], 387
    %458 = vst.msk [vmem:[%s457] ss:$8 sm:$0xf0] %vm454, %v453
    %s459 = scalar_lea.vmem %s0, 56
    %v460 = vld [vmem:[%s459] sm:$0xff]
    %461 = vrot.lane.b32.xlu0 %v460, 116
    %v462 = vpop.permute.xlu0 %461
    %vm463 = vcmask 31744
    %s464 = scalar_lea.vmem [#allocation0], 451
    %465 = vst.msk [vmem:[%s464] ss:$8 sm:$0xf] %vm463, %v462
    %s466 = scalar_lea.vmem [#allocation0], 451
    %467 = vst.msk [vmem:[%s466] ss:$8 sm:$0xf0] %vm463, %v462
    %s468 = scalar_lea.vmem %s0, 64
    %v469 = vld [vmem:[%s468] sm:$0xff]
    %470 = vrot.lane.b32.xlu0 %v469, 116
    %v471 = vpop.permute.xlu0 %470
    %vm472 = vcmask 31744
    %s473 = scalar_lea.vmem [#allocation0], 515
    %474 = vst.msk [vmem:[%s473] ss:$8 sm:$0xf] %vm472, %v471
    %s475 = scalar_lea.vmem [#allocation0], 515
    %476 = vst.msk [vmem:[%s475] ss:$8 sm:$0xf0] %vm472, %v471
    %s477 = scalar_lea.vmem %s0, 72
    %v478 = vld [vmem:[%s477] sm:$0xff]
    %479 = vrot.lane.b32.xlu0 %v478, 116
    %v480 = vpop.permute.xlu0 %479
    %vm481 = vcmask 31744
    %s482 = scalar_lea.vmem [#allocation0], 579
    %483 = vst.msk [vmem:[%s482] ss:$8 sm:$0xf] %vm481, %v480
    %s484 = scalar_lea.vmem [#allocation0], 579
    %485 = vst.msk [vmem:[%s484] ss:$8 sm:$0xf0] %vm481, %v480
    %s486 = scalar_lea.vmem %s0, 80
    %v487 = vld [vmem:[%s486] sm:$0xff]
    %488 = vrot.lane.b32.xlu0 %v487, 116
    %v489 = vpop.permute.xlu0 %488
    %vm490 = vcmask 31744
    %s491 = scalar_lea.vmem [#allocation0], 643
    %492 = vst.msk [vmem:[%s491] ss:$8 sm:$0xf] %vm490, %v489
    %s493 = scalar_lea.vmem [#allocation0], 643
    %494 = vst.msk [vmem:[%s493] ss:$8 sm:$0xf0] %vm490, %v489
    %s495 = scalar_lea.vmem %s0, 88
    %v496 = vld [vmem:[%s495] sm:$0xff]
    %497 = vrot.lane.b32.xlu0 %v496, 116
    %v498 = vpop.permute.xlu0 %497
    %vm499 = vcmask 31744
    %s500 = scalar_lea.vmem [#allocation0], 707
    %501 = vst.msk [vmem:[%s500] ss:$8 sm:$0xf] %vm499, %v498
    %s502 = scalar_lea.vmem [#allocation0], 707
    %503 = vst.msk [vmem:[%s502] ss:$8 sm:$0xf0] %vm499, %v498
    %s504 = scalar_lea.vmem %s0, 96
    %v505 = vld [vmem:[%s504] sm:$0xff]
    %506 = vrot.lane.b32.xlu0 %v505, 116
    %v507 = vpop.permute.xlu0 %506
    %vm508 = vcmask 31744
    %s509 = scalar_lea.vmem [#allocation0], 771
    %510 = vst.msk [vmem:[%s509] ss:$8 sm:$0xf] %vm508, %v507
    %s511 = scalar_lea.vmem [#allocation0], 771
    %512 = vst.msk [vmem:[%s511] ss:$8 sm:$0xf0] %vm508, %v507
    %s513 = scalar_lea.vmem %s0, 104
    %v514 = vld [vmem:[%s513] sm:$0xff]
    %515 = vrot.lane.b32.xlu0 %v514, 116
    %v516 = vpop.permute.xlu0 %515
    %vm517 = vcmask 31744
    %s518 = scalar_lea.vmem [#allocation0], 835
    %519 = vst.msk [vmem:[%s518] ss:$8 sm:$0xf] %vm517, %v516
    %s520 = scalar_lea.vmem [#allocation0], 835
    %521 = vst.msk [vmem:[%s520] ss:$8 sm:$0xf0] %vm517, %v516
    %s522 = scalar_lea.vmem %s0, 112
    %v523 = vld [vmem:[%s522] sm:$0xff]
    %524 = vrot.lane.b32.xlu0 %v523, 116
    %v525 = vpop.permute.xlu0 %524
    %vm526 = vcmask 31744
    %s527 = scalar_lea.vmem [#allocation0], 899
    %528 = vst.msk [vmem:[%s527] ss:$8 sm:$0xf] %vm526, %v525
    %s529 = scalar_lea.vmem [#allocation0], 899
    %530 = vst.msk [vmem:[%s529] ss:$8 sm:$0xf0] %vm526, %v525
    %s531 = scalar_lea.vmem %s0, 120
    %v532 = vld [vmem:[%s531] sm:$0xff]
    %533 = vrot.lane.b32.xlu0 %v532, 116
    %v534 = vpop.permute.xlu0 %533
    %vm535 = vcmask 31744
    %s536 = scalar_lea.vmem [#allocation0], 963
    %537 = vst.msk [vmem:[%s536] ss:$8 sm:$0xf] %vm535, %v534
    %s538 = scalar_lea.vmem [#allocation0], 963
    %539 = vst.msk [vmem:[%s538] ss:$8 sm:$0xf0] %vm535, %v534
    %s541 = ssub.s32 16, 1
    %v542 = vld [vmem:[#allocation0] sm:%s541]
    %s544 = ssub.s32 16, 1
    %545 = vst [vmem:[%s1] sm:%s544] %v542
    %s546 = scalar_lea.vmem [#allocation0], 8
    %v547 = vld [vmem:[%s546] sm:%s541]
    %s549 = ssub.s32 16, 1
    %s550 = scalar_lea.vmem %s1, 4
    %551 = vst [vmem:[%s550] sm:%s549] %v547
    %s552 = scalar_lea.vmem [#allocation0], 16
    %v553 = vld [vmem:[%s552] sm:%s541]
    %s555 = ssub.s32 16, 1
    %s556 = scalar_lea.vmem %s1, 8
    %557 = vst [vmem:[%s556] sm:%s555] %v553
    %s558 = scalar_lea.vmem [#allocation0], 24
    %v559 = vld [vmem:[%s558] sm:%s541]
    %s561 = ssub.s32 16, 1
    %s562 = scalar_lea.vmem %s1, 12
    %563 = vst [vmem:[%s562] sm:%s561] %v559
    %s564 = scalar_lea.vmem [#allocation0], 32
    %v565 = vld [vmem:[%s564] sm:%s541]
    %s567 = ssub.s32 16, 1
    %s568 = scalar_lea.vmem %s1, 16
    %569 = vst [vmem:[%s568] sm:%s567] %v565
    %s570 = scalar_lea.vmem [#allocation0], 40
    %v571 = vld [vmem:[%s570] sm:%s541]
    %s573 = ssub.s32 16, 1
    %s574 = scalar_lea.vmem %s1, 20
    %575 = vst [vmem:[%s574] sm:%s573] %v571
    %s576 = scalar_lea.vmem [#allocation0], 48
    %v577 = vld [vmem:[%s576] sm:%s541]
    %s579 = ssub.s32 16, 1
    %s580 = scalar_lea.vmem %s1, 24
    %581 = vst [vmem:[%s580] sm:%s579] %v577
    %s582 = scalar_lea.vmem [#allocation0], 56
    %v583 = vld [vmem:[%s582] sm:%s541]
    %s585 = ssub.s32 16, 1
    %s586 = scalar_lea.vmem %s1, 28
    %587 = vst [vmem:[%s586] sm:%s585] %v583
    %s588 = scalar_lea.vmem [#allocation0], 64
    %v589 = vld [vmem:[%s588] sm:%s541]
    %s591 = ssub.s32 16, 1
    %s592 = scalar_lea.vmem %s1, 32
    %593 = vst [vmem:[%s592] sm:%s591] %v589
    %s594 = scalar_lea.vmem [#allocation0], 72
    %v595 = vld [vmem:[%s594] sm:%s541]
    %s597 = ssub.s32 16, 1
    %s598 = scalar_lea.vmem %s1, 36
    %599 = vst [vmem:[%s598] sm:%s597] %v595
    %s600 = scalar_lea.vmem [#allocation0], 80
    %v601 = vld [vmem:[%s600] sm:%s541]
    %s603 = ssub.s32 16, 1
    %s604 = scalar_lea.vmem %s1, 40
    %605 = vst [vmem:[%s604] sm:%s603] %v601
    %s606 = scalar_lea.vmem [#allocation0], 88
    %v607 = vld [vmem:[%s606] sm:%s541]
    %s609 = ssub.s32 16, 1
    %s610 = scalar_lea.vmem %s1, 44
    %611 = vst [vmem:[%s610] sm:%s609] %v607
    %s612 = scalar_lea.vmem [#allocation0], 96
    %v613 = vld [vmem:[%s612] sm:%s541]
    %s615 = ssub.s32 16, 1
    %s616 = scalar_lea.vmem %s1, 48
    %617 = vst [vmem:[%s616] sm:%s615] %v613
    %s618 = scalar_lea.vmem [#allocation0], 104
    %v619 = vld [vmem:[%s618] sm:%s541]
    %s621 = ssub.s32 16, 1
    %s622 = scalar_lea.vmem %s1, 52
    %623 = vst [vmem:[%s622] sm:%s621] %v619
    %s624 = scalar_lea.vmem [#allocation0], 112
    %v625 = vld [vmem:[%s624] sm:%s541]
    %s627 = ssub.s32 16, 1
    %s628 = scalar_lea.vmem %s1, 56
    %629 = vst [vmem:[%s628] sm:%s627] %v625
    %s630 = scalar_lea.vmem [#allocation0], 120
    %v631 = vld [vmem:[%s630] sm:%s541]
    %s633 = ssub.s32 16, 1
    %s634 = scalar_lea.vmem %s1, 60
    %635 = vst [vmem:[%s634] sm:%s633] %v631
    %s636 = scalar_lea.vmem [#allocation0], 128
    %v637 = vld [vmem:[%s636] sm:%s541]
    %s639 = ssub.s32 16, 1
    %s640 = scalar_lea.vmem %s1, 64
    %641 = vst [vmem:[%s640] sm:%s639] %v637
    %s642 = scalar_lea.vmem [#allocation0], 136
    %v643 = vld [vmem:[%s642] sm:%s541]
    %s645 = ssub.s32 16, 1
    %s646 = scalar_lea.vmem %s1, 68
    %647 = vst [vmem:[%s646] sm:%s645] %v643
    %s648 = scalar_lea.vmem [#allocation0], 144
    %v649 = vld [vmem:[%s648] sm:%s541]
    %s651 = ssub.s32 16, 1
    %s652 = scalar_lea.vmem %s1, 72
    %653 = vst [vmem:[%s652] sm:%s651] %v649
    %s654 = scalar_lea.vmem [#allocation0], 152
    %v655 = vld [vmem:[%s654] sm:%s541]
    %s657 = ssub.s32 16, 1
    %s658 = scalar_lea.vmem %s1, 76
    %659 = vst [vmem:[%s658] sm:%s657] %v655
    %s660 = scalar_lea.vmem [#allocation0], 160
    %v661 = vld [vmem:[%s660] sm:%s541]
    %s663 = ssub.s32 16, 1
    %s664 = scalar_lea.vmem %s1, 80
    %665 = vst [vmem:[%s664] sm:%s663] %v661
    %s666 = scalar_lea.vmem [#allocation0], 168
    %v667 = vld [vmem:[%s666] sm:%s541]
    %s669 = ssub.s32 16, 1
    %s670 = scalar_lea.vmem %s1, 84
    %671 = vst [vmem:[%s670] sm:%s669] %v667
    %s672 = scalar_lea.vmem [#allocation0], 176
    %v673 = vld [vmem:[%s672] sm:%s541]
    %s675 = ssub.s32 16, 1
    %s676 = scalar_lea.vmem %s1, 88
    %677 = vst [vmem:[%s676] sm:%s675] %v673
    %s678 = scalar_lea.vmem [#allocation0], 184
    %v679 = vld [vmem:[%s678] sm:%s541]
    %s681 = ssub.s32 16, 1
    %s682 = scalar_lea.vmem %s1, 92
    %683 = vst [vmem:[%s682] sm:%s681] %v679
    %s684 = scalar_lea.vmem [#allocation0], 192
    %v685 = vld [vmem:[%s684] sm:%s541]
    %s687 = ssub.s32 16, 1
    %s688 = scalar_lea.vmem %s1, 96
    %689 = vst [vmem:[%s688] sm:%s687] %v685
    %s690 = scalar_lea.vmem [#allocation0], 200
    %v691 = vld [vmem:[%s690] sm:%s541]
    %s693 = ssub.s32 16, 1
    %s694 = scalar_lea.vmem %s1, 100
    %695 = vst [vmem:[%s694] sm:%s693] %v691
    %s696 = scalar_lea.vmem [#allocation0], 208
    %v697 = vld [vmem:[%s696] sm:%s541]
    %s699 = ssub.s32 16, 1
    %s700 = scalar_lea.vmem %s1, 104
    %701 = vst [vmem:[%s700] sm:%s699] %v697
    %s702 = scalar_lea.vmem [#allocation0], 216
    %v703 = vld [vmem:[%s702] sm:%s541]
    %s705 = ssub.s32 16, 1
    %s706 = scalar_lea.vmem %s1, 108
    %707 = vst [vmem:[%s706] sm:%s705] %v703
    %s708 = scalar_lea.vmem [#allocation0], 224
    %v709 = vld [vmem:[%s708] sm:%s541]
    %s711 = ssub.s32 16, 1
    %s712 = scalar_lea.vmem %s1, 112
    %713 = vst [vmem:[%s712] sm:%s711] %v709
    %s714 = scalar_lea.vmem [#allocation0], 232
    %v715 = vld [vmem:[%s714] sm:%s541]
    %s717 = ssub.s32 16, 1
    %s718 = scalar_lea.vmem %s1, 116
    %719 = vst [vmem:[%s718] sm:%s717] %v715
    %s720 = scalar_lea.vmem [#allocation0], 240
    %v721 = vld [vmem:[%s720] sm:%s541]
    %s723 = ssub.s32 16, 1
    %s724 = scalar_lea.vmem %s1, 120
    %725 = vst [vmem:[%s724] sm:%s723] %v721
    %s726 = scalar_lea.vmem [#allocation0], 248
    %v727 = vld [vmem:[%s726] sm:%s541]
    %s729 = ssub.s32 16, 1
    %s730 = scalar_lea.vmem %s1, 124
    %731 = vst [vmem:[%s730] sm:%s729] %v727
    %s732 = scalar_lea.vmem [#allocation0], 256
    %v733 = vld [vmem:[%s732] sm:%s541]
    %s735 = ssub.s32 16, 1
    %s736 = scalar_lea.vmem %s1, 128
    %737 = vst [vmem:[%s736] sm:%s735] %v733
    %s738 = scalar_lea.vmem [#allocation0], 264
    %v739 = vld [vmem:[%s738] sm:%s541]
    %s741 = ssub.s32 16, 1
    %s742 = scalar_lea.vmem %s1, 132
    %743 = vst [vmem:[%s742] sm:%s741] %v739
    %s744 = scalar_lea.vmem [#allocation0], 272
    %v745 = vld [vmem:[%s744] sm:%s541]
    %s747 = ssub.s32 16, 1
    %s748 = scalar_lea.vmem %s1, 136
    %749 = vst [vmem:[%s748] sm:%s747] %v745
    %s750 = scalar_lea.vmem [#allocation0], 280
    %v751 = vld [vmem:[%s750] sm:%s541]
    %s753 = ssub.s32 16, 1
    %s754 = scalar_lea.vmem %s1, 140
    %755 = vst [vmem:[%s754] sm:%s753] %v751
    %s756 = scalar_lea.vmem [#allocation0], 288
    %v757 = vld [vmem:[%s756] sm:%s541]
    %s759 = ssub.s32 16, 1
    %s760 = scalar_lea.vmem %s1, 144
    %761 = vst [vmem:[%s760] sm:%s759] %v757
    %s762 = scalar_lea.vmem [#allocation0], 296
    %v763 = vld [vmem:[%s762] sm:%s541]
    %s765 = ssub.s32 16, 1
    %s766 = scalar_lea.vmem %s1, 148
    %767 = vst [vmem:[%s766] sm:%s765] %v763
    %s768 = scalar_lea.vmem [#allocation0], 304
    %v769 = vld [vmem:[%s768] sm:%s541]
    %s771 = ssub.s32 16, 1
    %s772 = scalar_lea.vmem %s1, 152
    %773 = vst [vmem:[%s772] sm:%s771] %v769
    %s774 = scalar_lea.vmem [#allocation0], 312
    %v775 = vld [vmem:[%s774] sm:%s541]
    %s777 = ssub.s32 16, 1
    %s778 = scalar_lea.vmem %s1, 156
    %779 = vst [vmem:[%s778] sm:%s777] %v775
    %s780 = scalar_lea.vmem [#allocation0], 320
    %v781 = vld [vmem:[%s780] sm:%s541]
    %s783 = ssub.s32 16, 1
    %s784 = scalar_lea.vmem %s1, 160
    %785 = vst [vmem:[%s784] sm:%s783] %v781
    %s786 = scalar_lea.vmem [#allocation0], 328
    %v787 = vld [vmem:[%s786] sm:%s541]
    %s789 = ssub.s32 16, 1
    %s790 = scalar_lea.vmem %s1, 164
    %791 = vst [vmem:[%s790] sm:%s789] %v787
    %s792 = scalar_lea.vmem [#allocation0], 336
    %v793 = vld [vmem:[%s792] sm:%s541]
    %s795 = ssub.s32 16, 1
    %s796 = scalar_lea.vmem %s1, 168
    %797 = vst [vmem:[%s796] sm:%s795] %v793
    %s798 = scalar_lea.vmem [#allocation0], 344
    %v799 = vld [vmem:[%s798] sm:%s541]
    %s801 = ssub.s32 16, 1
    %s802 = scalar_lea.vmem %s1, 172
    %803 = vst [vmem:[%s802] sm:%s801] %v799
    %s804 = scalar_lea.vmem [#allocation0], 352
    %v805 = vld [vmem:[%s804] sm:%s541]
    %s807 = ssub.s32 16, 1
    %s808 = scalar_lea.vmem %s1, 176
    %809 = vst [vmem:[%s808] sm:%s807] %v805
    %s810 = scalar_lea.vmem [#allocation0], 360
    %v811 = vld [vmem:[%s810] sm:%s541]
    %s813 = ssub.s32 16, 1
    %s814 = scalar_lea.vmem %s1, 180
    %815 = vst [vmem:[%s814] sm:%s813] %v811
    %s816 = scalar_lea.vmem [#allocation0], 368
    %v817 = vld [vmem:[%s816] sm:%s541]
    %s819 = ssub.s32 16, 1
    %s820 = scalar_lea.vmem %s1, 184
    %821 = vst [vmem:[%s820] sm:%s819] %v817
    %s822 = scalar_lea.vmem [#allocation0], 376
    %v823 = vld [vmem:[%s822] sm:%s541]
    %s825 = ssub.s32 16, 1
    %s826 = scalar_lea.vmem %s1, 188
    %827 = vst [vmem:[%s826] sm:%s825] %v823
    %s828 = scalar_lea.vmem [#allocation0], 384
    %v829 = vld [vmem:[%s828] sm:%s541]
    %s831 = ssub.s32 16, 1
    %s832 = scalar_lea.vmem %s1, 192
    %833 = vst [vmem:[%s832] sm:%s831] %v829
    %s834 = scalar_lea.vmem [#allocation0], 392
    %v835 = vld [vmem:[%s834] sm:%s541]
    %s837 = ssub.s32 16, 1
    %s838 = scalar_lea.vmem %s1, 196
    %839 = vst [vmem:[%s838] sm:%s837] %v835
    %s840 = scalar_lea.vmem [#allocation0], 400
    %v841 = vld [vmem:[%s840] sm:%s541]
    %s843 = ssub.s32 16, 1
    %s844 = scalar_lea.vmem %s1, 200
    %845 = vst [vmem:[%s844] sm:%s843] %v841
    %s846 = scalar_lea.vmem [#allocation0], 408
    %v847 = vld [vmem:[%s846] sm:%s541]
    %s849 = ssub.s32 16, 1
    %s850 = scalar_lea.vmem %s1, 204
    %851 = vst [vmem:[%s850] sm:%s849] %v847
    %s852 = scalar_lea.vmem [#allocation0], 416
    %v853 = vld [vmem:[%s852] sm:%s541]
    %s855 = ssub.s32 16, 1
    %s856 = scalar_lea.vmem %s1, 208
    %857 = vst [vmem:[%s856] sm:%s855] %v853
    %s858 = scalar_lea.vmem [#allocation0], 424
    %v859 = vld [vmem:[%s858] sm:%s541]
    %s861 = ssub.s32 16, 1
    %s862 = scalar_lea.vmem %s1, 212
    %863 = vst [vmem:[%s862] sm:%s861] %v859
    %s864 = scalar_lea.vmem [#allocation0], 432
    %v865 = vld [vmem:[%s864] sm:%s541]
    %s867 = ssub.s32 16, 1
    %s868 = scalar_lea.vmem %s1, 216
    %869 = vst [vmem:[%s868] sm:%s867] %v865
    %s870 = scalar_lea.vmem [#allocation0], 440
    %v871 = vld [vmem:[%s870] sm:%s541]
    %s873 = ssub.s32 16, 1
    %s874 = scalar_lea.vmem %s1, 220
    %875 = vst [vmem:[%s874] sm:%s873] %v871
    %s876 = scalar_lea.vmem [#allocation0], 448
    %v877 = vld [vmem:[%s876] sm:%s541]
    %s879 = ssub.s32 16, 1
    %s880 = scalar_lea.vmem %s1, 224
    %881 = vst [vmem:[%s880] sm:%s879] %v877
    %s882 = scalar_lea.vmem [#allocation0], 456
    %v883 = vld [vmem:[%s882] sm:%s541]
    %s885 = ssub.s32 16, 1
    %s886 = scalar_lea.vmem %s1, 228
    %887 = vst [vmem:[%s886] sm:%s885] %v883
    %s888 = scalar_lea.vmem [#allocation0], 464
    %v889 = vld [vmem:[%s888] sm:%s541]
    %s891 = ssub.s32 16, 1
    %s892 = scalar_lea.vmem %s1, 232
    %893 = vst [vmem:[%s892] sm:%s891] %v889
    %s894 = scalar_lea.vmem [#allocation0], 472
    %v895 = vld [vmem:[%s894] sm:%s541]
    %s897 = ssub.s32 16, 1
    %s898 = scalar_lea.vmem %s1, 236
    %899 = vst [vmem:[%s898] sm:%s897] %v895
    %s900 = scalar_lea.vmem [#allocation0], 480
    %v901 = vld [vmem:[%s900] sm:%s541]
    %s903 = ssub.s32 16, 1
    %s904 = scalar_lea.vmem %s1, 240
    %905 = vst [vmem:[%s904] sm:%s903] %v901
    %s906 = scalar_lea.vmem [#allocation0], 488
    %v907 = vld [vmem:[%s906] sm:%s541]
    %s909 = ssub.s32 16, 1
    %s910 = scalar_lea.vmem %s1, 244
    %911 = vst [vmem:[%s910] sm:%s909] %v907
    %s912 = scalar_lea.vmem [#allocation0], 496
    %v913 = vld [vmem:[%s912] sm:%s541]
    %s915 = ssub.s32 16, 1
    %s916 = scalar_lea.vmem %s1, 248
    %917 = vst [vmem:[%s916] sm:%s915] %v913
    %s918 = scalar_lea.vmem [#allocation0], 504
    %v919 = vld [vmem:[%s918] sm:%s541]
    %s921 = ssub.s32 16, 1
    %s922 = scalar_lea.vmem %s1, 252
    %923 = vst [vmem:[%s922] sm:%s921] %v919
    %s924 = scalar_lea.vmem [#allocation0], 512
    %v925 = vld [vmem:[%s924] sm:%s541]
    %s927 = ssub.s32 16, 1
    %s928 = scalar_lea.vmem %s1, 256
    %929 = vst [vmem:[%s928] sm:%s927] %v925
    %s930 = scalar_lea.vmem [#allocation0], 520
    %v931 = vld [vmem:[%s930] sm:%s541]
    %s933 = ssub.s32 16, 1
    %s934 = scalar_lea.vmem %s1, 260
    %935 = vst [vmem:[%s934] sm:%s933] %v931
    %s936 = scalar_lea.vmem [#allocation0], 528
    %v937 = vld [vmem:[%s936] sm:%s541]
    %s939 = ssub.s32 16, 1
    %s940 = scalar_lea.vmem %s1, 264
    %941 = vst [vmem:[%s940] sm:%s939] %v937
    %s942 = scalar_lea.vmem [#allocation0], 536
    %v943 = vld [vmem:[%s942] sm:%s541]
    %s945 = ssub.s32 16, 1
    %s946 = scalar_lea.vmem %s1, 268
    %947 = vst [vmem:[%s946] sm:%s945] %v943
    %s948 = scalar_lea.vmem [#allocation0], 544
    %v949 = vld [vmem:[%s948] sm:%s541]
    %s951 = ssub.s32 16, 1
    %s952 = scalar_lea.vmem %s1, 272
    %953 = vst [vmem:[%s952] sm:%s951] %v949
    %s954 = scalar_lea.vmem [#allocation0], 552
    %v955 = vld [vmem:[%s954] sm:%s541]
    %s957 = ssub.s32 16, 1
    %s958 = scalar_lea.vmem %s1, 276
    %959 = vst [vmem:[%s958] sm:%s957] %v955
    %s960 = scalar_lea.vmem [#allocation0], 560
    %v961 = vld [vmem:[%s960] sm:%s541]
    %s963 = ssub.s32 16, 1
    %s964 = scalar_lea.vmem %s1, 280
    %965 = vst [vmem:[%s964] sm:%s963] %v961
    %s966 = scalar_lea.vmem [#allocation0], 568
    %v967 = vld [vmem:[%s966] sm:%s541]
    %s969 = ssub.s32 16, 1
    %s970 = scalar_lea.vmem %s1, 284
    %971 = vst [vmem:[%s970] sm:%s969] %v967
    %s972 = scalar_lea.vmem [#allocation0], 576
    %v973 = vld [vmem:[%s972] sm:%s541]
    %s975 = ssub.s32 16, 1
    %s976 = scalar_lea.vmem %s1, 288
    %977 = vst [vmem:[%s976] sm:%s975] %v973
    %s978 = scalar_lea.vmem [#allocation0], 584
    %v979 = vld [vmem:[%s978] sm:%s541]
    %s981 = ssub.s32 16, 1
    %s982 = scalar_lea.vmem %s1, 292
    %983 = vst [vmem:[%s982] sm:%s981] %v979
    %s984 = scalar_lea.vmem [#allocation0], 592
    %v985 = vld [vmem:[%s984] sm:%s541]
    %s987 = ssub.s32 16, 1
    %s988 = scalar_lea.vmem %s1, 296
    %989 = vst [vmem:[%s988] sm:%s987] %v985
    %s990 = scalar_lea.vmem [#allocation0], 600
    %v991 = vld [vmem:[%s990] sm:%s541]
    %s993 = ssub.s32 16, 1
    %s994 = scalar_lea.vmem %s1, 300
    %995 = vst [vmem:[%s994] sm:%s993] %v991
    %s996 = scalar_lea.vmem [#allocation0], 608
    %v997 = vld [vmem:[%s996] sm:%s541]
    %s999 = ssub.s32 16, 1
    %s1000 = scalar_lea.vmem %s1, 304
    %1001 = vst [vmem:[%s1000] sm:%s999] %v997
    %s1002 = scalar_lea.vmem [#allocation0], 616
    %v1003 = vld [vmem:[%s1002] sm:%s541]
    %s1005 = ssub.s32 16, 1
    %s1006 = scalar_lea.vmem %s1, 308
    %1007 = vst [vmem:[%s1006] sm:%s1005] %v1003
    %s1008 = scalar_lea.vmem [#allocation0], 624
    %v1009 = vld [vmem:[%s1008] sm:%s541]
    %s1011 = ssub.s32 16, 1
    %s1012 = scalar_lea.vmem %s1, 312
    %1013 = vst [vmem:[%s1012] sm:%s1011] %v1009
    %s1014 = scalar_lea.vmem [#allocation0], 632
    %v1015 = vld [vmem:[%s1014] sm:%s541]
    %s1017 = ssub.s32 16, 1
    %s1018 = scalar_lea.vmem %s1, 316
    %1019 = vst [vmem:[%s1018] sm:%s1017] %v1015
    %s1020 = scalar_lea.vmem [#allocation0], 640
    %v1021 = vld [vmem:[%s1020] sm:%s541]
    %s1023 = ssub.s32 16, 1
    %s1024 = scalar_lea.vmem %s1, 320
    %1025 = vst [vmem:[%s1024] sm:%s1023] %v1021
    %s1026 = scalar_lea.vmem [#allocation0], 648
    %v1027 = vld [vmem:[%s1026] sm:%s541]
    %s1029 = ssub.s32 16, 1
    %s1030 = scalar_lea.vmem %s1, 324
    %1031 = vst [vmem:[%s1030] sm:%s1029] %v1027
    %s1032 = scalar_lea.vmem [#allocation0], 656
    %v1033 = vld [vmem:[%s1032] sm:%s541]
    %s1035 = ssub.s32 16, 1
    %s1036 = scalar_lea.vmem %s1, 328
    %1037 = vst [vmem:[%s1036] sm:%s1035] %v1033
    %s1038 = scalar_lea.vmem [#allocation0], 664
    %v1039 = vld [vmem:[%s1038] sm:%s541]
    %s1041 = ssub.s32 16, 1
    %s1042 = scalar_lea.vmem %s1, 332
    %1043 = vst [vmem:[%s1042] sm:%s1041] %v1039
    %s1044 = scalar_lea.vmem [#allocation0], 672
    %v1045 = vld [vmem:[%s1044] sm:%s541]
    %s1047 = ssub.s32 16, 1
    %s1048 = scalar_lea.vmem %s1, 336
    %1049 = vst [vmem:[%s1048] sm:%s1047] %v1045
    %s1050 = scalar_lea.vmem [#allocation0], 680
    %v1051 = vld [vmem:[%s1050] sm:%s541]
    %s1053 = ssub.s32 16, 1
    %s1054 = scalar_lea.vmem %s1, 340
    %1055 = vst [vmem:[%s1054] sm:%s1053] %v1051
    %s1056 = scalar_lea.vmem [#allocation0], 688
    %v1057 = vld [vmem:[%s1056] sm:%s541]
    %s1059 = ssub.s32 16, 1
    %s1060 = scalar_lea.vmem %s1, 344
    %1061 = vst [vmem:[%s1060] sm:%s1059] %v1057
    %s1062 = scalar_lea.vmem [#allocation0], 696
    %v1063 = vld [vmem:[%s1062] sm:%s541]
    %s1065 = ssub.s32 16, 1
    %s1066 = scalar_lea.vmem %s1, 348
    %1067 = vst [vmem:[%s1066] sm:%s1065] %v1063
    %s1068 = scalar_lea.vmem [#allocation0], 704
    %v1069 = vld [vmem:[%s1068] sm:%s541]
    %s1071 = ssub.s32 16, 1
    %s1072 = scalar_lea.vmem %s1, 352
    %1073 = vst [vmem:[%s1072] sm:%s1071] %v1069
    %s1074 = scalar_lea.vmem [#allocation0], 712
    %v1075 = vld [vmem:[%s1074] sm:%s541]
    %s1077 = ssub.s32 16, 1
    %s1078 = scalar_lea.vmem %s1, 356
    %1079 = vst [vmem:[%s1078] sm:%s1077] %v1075
    %s1080 = scalar_lea.vmem [#allocation0], 720
    %v1081 = vld [vmem:[%s1080] sm:%s541]
    %s1083 = ssub.s32 16, 1
    %s1084 = scalar_lea.vmem %s1, 360
    %1085 = vst [vmem:[%s1084] sm:%s1083] %v1081
    %s1086 = scalar_lea.vmem [#allocation0], 728
    %v1087 = vld [vmem:[%s1086] sm:%s541]
    %s1089 = ssub.s32 16, 1
    %s1090 = scalar_lea.vmem %s1, 364
    %1091 = vst [vmem:[%s1090] sm:%s1089] %v1087
    %s1092 = scalar_lea.vmem [#allocation0], 736
    %v1093 = vld [vmem:[%s1092] sm:%s541]
    %s1095 = ssub.s32 16, 1
    %s1096 = scalar_lea.vmem %s1, 368
    %1097 = vst [vmem:[%s1096] sm:%s1095] %v1093
    %s1098 = scalar_lea.vmem [#allocation0], 744
    %v1099 = vld [vmem:[%s1098] sm:%s541]
    %s1101 = ssub.s32 16, 1
    %s1102 = scalar_lea.vmem %s1, 372
    %1103 = vst [vmem:[%s1102] sm:%s1101] %v1099
    %s1104 = scalar_lea.vmem [#allocation0], 752
    %v1105 = vld [vmem:[%s1104] sm:%s541]
    %s1107 = ssub.s32 16, 1
    %s1108 = scalar_lea.vmem %s1, 376
    %1109 = vst [vmem:[%s1108] sm:%s1107] %v1105
    %s1110 = scalar_lea.vmem [#allocation0], 760
    %v1111 = vld [vmem:[%s1110] sm:%s541]
    %s1113 = ssub.s32 16, 1
    %s1114 = scalar_lea.vmem %s1, 380
    %1115 = vst [vmem:[%s1114] sm:%s1113] %v1111
    %s1116 = scalar_lea.vmem [#allocation0], 768
    %v1117 = vld [vmem:[%s1116] sm:%s541]
    %s1119 = ssub.s32 16, 1
    %s1120 = scalar_lea.vmem %s1, 384
    %1121 = vst [vmem:[%s1120] sm:%s1119] %v1117
    %s1122 = scalar_lea.vmem [#allocation0], 776
    %v1123 = vld [vmem:[%s1122] sm:%s541]
    %s1125 = ssub.s32 16, 1
    %s1126 = scalar_lea.vmem %s1, 388
    %1127 = vst [vmem:[%s1126] sm:%s1125] %v1123
    %s1128 = scalar_lea.vmem [#allocation0], 784
    %v1129 = vld [vmem:[%s1128] sm:%s541]
    %s1131 = ssub.s32 16, 1
    %s1132 = scalar_lea.vmem %s1, 392
    %1133 = vst [vmem:[%s1132] sm:%s1131] %v1129
    %s1134 = scalar_lea.vmem [#allocation0], 792
    %v1135 = vld [vmem:[%s1134] sm:%s541]
    %s1137 = ssub.s32 16, 1
    %s1138 = scalar_lea.vmem %s1, 396
    %1139 = vst [vmem:[%s1138] sm:%s1137] %v1135
    %s1140 = scalar_lea.vmem [#allocation0], 800
    %v1141 = vld [vmem:[%s1140] sm:%s541]
    %s1143 = ssub.s32 16, 1
    %s1144 = scalar_lea.vmem %s1, 400
    %1145 = vst [vmem:[%s1144] sm:%s1143] %v1141
    %s1146 = scalar_lea.vmem [#allocation0], 808
    %v1147 = vld [vmem:[%s1146] sm:%s541]
    %s1149 = ssub.s32 16, 1
    %s1150 = scalar_lea.vmem %s1, 404
    %1151 = vst [vmem:[%s1150] sm:%s1149] %v1147
    %s1152 = scalar_lea.vmem [#allocation0], 816
    %v1153 = vld [vmem:[%s1152] sm:%s541]
    %s1155 = ssub.s32 16, 1
    %s1156 = scalar_lea.vmem %s1, 408
    %1157 = vst [vmem:[%s1156] sm:%s1155] %v1153
    %s1158 = scalar_lea.vmem [#allocation0], 824
    %v1159 = vld [vmem:[%s1158] sm:%s541]
    %s1161 = ssub.s32 16, 1
    %s1162 = scalar_lea.vmem %s1, 412
    %1163 = vst [vmem:[%s1162] sm:%s1161] %v1159
    %s1164 = scalar_lea.vmem [#allocation0], 832
    %v1165 = vld [vmem:[%s1164] sm:%s541]
    %s1167 = ssub.s32 16, 1
    %s1168 = scalar_lea.vmem %s1, 416
    %1169 = vst [vmem:[%s1168] sm:%s1167] %v1165
    %s1170 = scalar_lea.vmem [#allocation0], 840
    %v1171 = vld [vmem:[%s1170] sm:%s541]
    %s1173 = ssub.s32 16, 1
    %s1174 = scalar_lea.vmem %s1, 420
    %1175 = vst [vmem:[%s1174] sm:%s1173] %v1171
    %s1176 = scalar_lea.vmem [#allocation0], 848
    %v1177 = vld [vmem:[%s1176] sm:%s541]
    %s1179 = ssub.s32 16, 1
    %s1180 = scalar_lea.vmem %s1, 424
    %1181 = vst [vmem:[%s1180] sm:%s1179] %v1177
    %s1182 = scalar_lea.vmem [#allocation0], 856
    %v1183 = vld [vmem:[%s1182] sm:%s541]
    %s1185 = ssub.s32 16, 1
    %s1186 = scalar_lea.vmem %s1, 428
    %1187 = vst [vmem:[%s1186] sm:%s1185] %v1183
    %s1188 = scalar_lea.vmem [#allocation0], 864
    %v1189 = vld [vmem:[%s1188] sm:%s541]
    %s1191 = ssub.s32 16, 1
    %s1192 = scalar_lea.vmem %s1, 432
    %1193 = vst [vmem:[%s1192] sm:%s1191] %v1189
    %s1194 = scalar_lea.vmem [#allocation0], 872
    %v1195 = vld [vmem:[%s1194] sm:%s541]
    %s1197 = ssub.s32 16, 1
    %s1198 = scalar_lea.vmem %s1, 436
    %1199 = vst [vmem:[%s1198] sm:%s1197] %v1195
    %s1200 = scalar_lea.vmem [#allocation0], 880
    %v1201 = vld [vmem:[%s1200] sm:%s541]
    %s1203 = ssub.s32 16, 1
    %s1204 = scalar_lea.vmem %s1, 440
    %1205 = vst [vmem:[%s1204] sm:%s1203] %v1201
    %s1206 = scalar_lea.vmem [#allocation0], 888
    %v1207 = vld [vmem:[%s1206] sm:%s541]
    %s1209 = ssub.s32 16, 1
    %s1210 = scalar_lea.vmem %s1, 444
    %1211 = vst [vmem:[%s1210] sm:%s1209] %v1207
    %s1212 = scalar_lea.vmem [#allocation0], 896
    %v1213 = vld [vmem:[%s1212] sm:%s541]
    %s1215 = ssub.s32 16, 1
    %s1216 = scalar_lea.vmem %s1, 448
    %1217 = vst [vmem:[%s1216] sm:%s1215] %v1213
    %s1218 = scalar_lea.vmem [#allocation0], 904
    %v1219 = vld [vmem:[%s1218] sm:%s541]
    %s1221 = ssub.s32 16, 1
    %s1222 = scalar_lea.vmem %s1, 452
    %1223 = vst [vmem:[%s1222] sm:%s1221] %v1219
    %s1224 = scalar_lea.vmem [#allocation0], 912
    %v1225 = vld [vmem:[%s1224] sm:%s541]
    %s1227 = ssub.s32 16, 1
    %s1228 = scalar_lea.vmem %s1, 456
    %1229 = vst [vmem:[%s1228] sm:%s1227] %v1225
    %s1230 = scalar_lea.vmem [#allocation0], 920
    %v1231 = vld [vmem:[%s1230] sm:%s541]
    %s1233 = ssub.s32 16, 1
    %s1234 = scalar_lea.vmem %s1, 460
    %1235 = vst [vmem:[%s1234] sm:%s1233] %v1231
    %s1236 = scalar_lea.vmem [#allocation0], 928
    %v1237 = vld [vmem:[%s1236] sm:%s541]
    %s1239 = ssub.s32 16, 1
    %s1240 = scalar_lea.vmem %s1, 464
    %1241 = vst [vmem:[%s1240] sm:%s1239] %v1237
    %s1242 = scalar_lea.vmem [#allocation0], 936
    %v1243 = vld [vmem:[%s1242] sm:%s541]
    %s1245 = ssub.s32 16, 1
    %s1246 = scalar_lea.vmem %s1, 468
    %1247 = vst [vmem:[%s1246] sm:%s1245] %v1243
    %s1248 = scalar_lea.vmem [#allocation0], 944
    %v1249 = vld [vmem:[%s1248] sm:%s541]
    %s1251 = ssub.s32 16, 1
    %s1252 = scalar_lea.vmem %s1, 472
    %1253 = vst [vmem:[%s1252] sm:%s1251] %v1249
    %s1254 = scalar_lea.vmem [#allocation0], 952
    %v1255 = vld [vmem:[%s1254] sm:%s541]
    %s1257 = ssub.s32 16, 1
    %s1258 = scalar_lea.vmem %s1, 476
    %1259 = vst [vmem:[%s1258] sm:%s1257] %v1255
    %s1260 = scalar_lea.vmem [#allocation0], 960
    %v1261 = vld [vmem:[%s1260] sm:%s541]
    %s1263 = ssub.s32 16, 1
    %s1264 = scalar_lea.vmem %s1, 480
    %1265 = vst [vmem:[%s1264] sm:%s1263] %v1261
    %s1266 = scalar_lea.vmem [#allocation0], 968
    %v1267 = vld [vmem:[%s1266] sm:%s541]
    %s1269 = ssub.s32 16, 1
    %s1270 = scalar_lea.vmem %s1, 484
    %1271 = vst [vmem:[%s1270] sm:%s1269] %v1267
    %s1272 = scalar_lea.vmem [#allocation0], 976
    %v1273 = vld [vmem:[%s1272] sm:%s541]
    %s1275 = ssub.s32 16, 1
    %s1276 = scalar_lea.vmem %s1, 488
    %1277 = vst [vmem:[%s1276] sm:%s1275] %v1273
    %s1278 = scalar_lea.vmem [#allocation0], 984
    %v1279 = vld [vmem:[%s1278] sm:%s541]
    %s1281 = ssub.s32 16, 1
    %s1282 = scalar_lea.vmem %s1, 492
    %1283 = vst [vmem:[%s1282] sm:%s1281] %v1279
    %s1284 = scalar_lea.vmem [#allocation0], 992
    %v1285 = vld [vmem:[%s1284] sm:%s541]
    %s1287 = ssub.s32 16, 1
    %s1288 = scalar_lea.vmem %s1, 496
    %1289 = vst [vmem:[%s1288] sm:%s1287] %v1285
    %s1290 = scalar_lea.vmem [#allocation0], 1000
    %v1291 = vld [vmem:[%s1290] sm:%s541]
    %s1293 = ssub.s32 16, 1
    %s1294 = scalar_lea.vmem %s1, 500
    %1295 = vst [vmem:[%s1294] sm:%s1293] %v1291
    %s1296 = scalar_lea.vmem [#allocation0], 1008
    %v1297 = vld [vmem:[%s1296] sm:%s541]
    %s1299 = ssub.s32 16, 1
    %s1300 = scalar_lea.vmem %s1, 504
    %1301 = vst [vmem:[%s1300] sm:%s1299] %v1297
    %s1302 = scalar_lea.vmem [#allocation0], 1016
    %v1303 = vld [vmem:[%s1302] sm:%s541]
    %s1305 = ssub.s32 16, 1
    %s1306 = scalar_lea.vmem %s1, 508
    %1307 = vst [vmem:[%s1306] sm:%s1305] %v1303

// kernel: _dconv2d2_forward.1
$region0: #{_dconv2d2_forward.1}
  #allocation0 [shape = 'u32[]', space=smem, size = 0x4, offset = 0x4, fixed_abs, tag = 'smem constant byte address 0x4 - core index']
  #allocation1 [shape = 'u32[72,128]{1,0:T(1,128)}', space=vmem, size = 0x9000, scoped, tag = 'internal scratch']
  %s0 = inlined_call_operand.vmem [shape: bf16[3,8,72], index: 0, kind: input, shape index: {}]
  %s1 = inlined_call_operand.vmem [shape: bf16[3,2,72,256], index: 1, kind: input, shape index: {}]
  %s2 = inlined_call_operand.vmem [shape: f32[3,2,8,256], index: 2, kind: output, shape index: {}]
  %s3 = sld [smem:[#allocation0]]
  $region41: #{_dconv2d2_forward.1} parent=0
    _
  %s5 = ssub.s32 1, %s3
  %s6 = scalar_select 0, %s5, %s3
  loop: start=0, step=1, limit=8
  $region2: #{_dconv2d2_forward.1} parent=0 // loop_pre_header
    _
  $region3: #{_dconv2d2_forward.1} parent=0 // loop_header
    %s8 = sphi 0, %s12
    %p9 = scmp.ge.s32.totalorder %s8, 8
    %s15 = sphi 0, %s34
    %s16 = sphi 0, %s30
    %s17 = sphi 0, %s26
    %s18 = sphi 0, %s15
    %s19 = sphi 0, %s16
    %s20 = sphi 0, %s17
    %s21 = sphi 0, %s18
    %s22 = sphi 0, %s19
    %s23 = sphi 0, %s20
    %s37 = sphi 0, %s39
    %s40 = sphi 0, %s37
    %s41 = sphi 0, %s40
    %s57 = sphi 0, %s41
    %s67 = sphi 0, %s69
    %s70 = sphi 0, %s67
    %s71 = sphi 0, %s70
    %s87 = sphi 0, %s71
    %s97 = sphi 0, %s99
    %s100 = sphi 0, %s97
    %s101 = sphi 0, %s100
    %s117 = sphi 0, %s101
  $region4: #{_dconv2d2_forward.1} parent=0 // loop_header_branch
    %11 = sbr.rel (%p9) target = $region8
  $region5: #{_dconv2d2_forward.1} parent=0 // loop_body
    %s13 = ssub.s32 %s8, 1
    %s14 = ssub.s32 %s8, 2
    %s24 = sadd.s32 1, %s17
    %p25 = scmp.ge.s32.totalorder %s24, 1
    %s26 = scalar_select %p25, 0, %s24
    %s27 = sadd.s32 1, %s16
    %s28 = scalar_select %p25, %s27, %s16
    %p29 = scmp.ge.s32.totalorder %s28, 2
    %s30 = scalar_select %p29, 0, %s28
    %s31 = sadd.s32 1, %s15
    %s32 = scalar_select %p29, %s31, %s15
    %p33 = scmp.ge.s32.totalorder %s32, 3
    %s34 = scalar_select %p33, 0, %s32
    %s35 = ssub.s32 %s15, %s34
    %p36 = scmp.eq.s32.totalorder %s35, 0
    %s38 = sadd.s32 %s37, 1
    %s39 = scalar_select %p36, %s37, %s38
    %p42 = pneg %p36
    %p43 = scmp.eq.s32.totalorder %s8, 5
    %p44 = por %p42, %p43
    %p45 = scmp.ne.s32.totalorder %s37, %s40
    %p46 = scmp.eq.s32.totalorder %s8, 0
    %p47 = por %p45, %p46
    %p48 = scmp.ne.s32.totalorder %s37, %s40
    %p49 = scmp.eq.s32.totalorder %s13, 5
    %p50 = por %p48, %p49
    %p51 = scmp.ne.s32.totalorder %s40, %s41
    %p52 = scmp.eq.s32.totalorder %s13, 0
    %p53 = por %p51, %p52
    %p54 = scmp.ne.s32.totalorder %s40, %s41
    %p55 = scmp.eq.s32.totalorder %s14, 5
    %p56 = por %p54, %p55
    %p58 = scmp.ne.s32.totalorder %s41, %s57
    %p59 = scmp.eq.s32.totalorder %s14, 0
    %p60 = por %p58, %p59
    %s61 = ssub.s32 %s15, %s34
    %s62 = ssub.s32 %s16, %s30
    %s63 = sor.u32 %s61, %s62
    %s64 = ssub.s32 %s17, %s26
    %s65 = sor.u32 %s63, %s64
    %p66 = scmp.eq.s32.totalorder %s65, 0
    %s68 = sadd.s32 %s67, 1
    %s69 = scalar_select %p66, %s67, %s68
    %p72 = pneg %p66
    %p73 = scmp.eq.s32.totalorder %s8, 5
    %p74 = por %p72, %p73
    %p75 = scmp.ne.s32.totalorder %s67, %s70
    %p76 = scmp.eq.s32.totalorder %s8, 0
    %p77 = por %p75, %p76
    %p78 = scmp.ne.s32.totalorder %s67, %s70
    %p79 = scmp.eq.s32.totalorder %s13, 5
    %p80 = por %p78, %p79
    %p81 = scmp.ne.s32.totalorder %s70, %s71
    %p82 = scmp.eq.s32.totalorder %s13, 0
    %p83 = por %p81, %p82
    %p84 = scmp.ne.s32.totalorder %s70, %s71
    %p85 = scmp.eq.s32.totalorder %s14, 5
    %p86 = por %p84, %p85
    %p88 = scmp.ne.s32.totalorder %s71, %s87
    %p89 = scmp.eq.s32.totalorder %s14, 0
    %p90 = por %p88, %p89
    %s91 = ssub.s32 %s15, %s34
    %s92 = ssub.s32 %s16, %s30
    %s93 = sor.u32 %s91, %s92
    %s94 = ssub.s32 %s17, %s26
    %s95 = sor.u32 %s93, %s94
    %p96 = scmp.eq.s32.totalorder %s95, 0
    %s98 = sadd.s32 %s97, 1
    %s99 = scalar_select %p96, %s97, %s98
    %p102 = pneg %p96
    %p103 = scmp.eq.s32.totalorder %s8, 5
    %p104 = por %p102, %p103
    %p105 = scmp.ne.s32.totalorder %s97, %s100
    %p106 = scmp.eq.s32.totalorder %s8, 0
    %p107 = por %p105, %p106
    %p108 = scmp.ne.s32.totalorder %s97, %s100
    %p109 = scmp.eq.s32.totalorder %s13, 5
    %p110 = por %p108, %p109
    %p111 = scmp.ne.s32.totalorder %s100, %s101
    %p112 = scmp.eq.s32.totalorder %s13, 0
    %p113 = por %p111, %p112
    %p114 = scmp.ne.s32.totalorder %s100, %s101
    %p115 = scmp.eq.s32.totalorder %s14, 5
    %p116 = por %p114, %p115
    %p118 = scmp.ne.s32.totalorder %s101, %s117
    %p119 = scmp.eq.s32.totalorder %s14, 0
    %p120 = por %p118, %p119
    %p121 = scmp.le.s32.totalorder 1, %s8
    %p122 = scmp.lt.s32.totalorder %s8, 7
    %p123 = pnand %p121, %p122
    %p124 = pneg %p123
    // Predicated region
    $region9: #{_dconv2d2_forward.1} parent=5 // pred_check
      _
    $region10: #{_dconv2d2_forward.1} parent=5 // pred_check_branch
      %126 = sbr.rel (%p123) target = $region12
    $region11: #{_dconv2d2_forward.1} parent=5 // pred_region
      %s127 = ssub.s32 %s8, 1
    $region12: #{_dconv2d2_forward.1} parent=5 // pred_fallthru
      _
    %p128 = scmp.lt.s32.totalorder %s8, 6
    // Predicated region
    $region13: #{_dconv2d2_forward.1} parent=5 // pred_check
      %p129 = pneg %p128
    $region14: #{_dconv2d2_forward.1} parent=5 // pred_check_branch
      %131 = sbr.rel (%p129) target = $region16
    $region15: #{_dconv2d2_forward.1} parent=5 // pred_region
      // Predicated region
      $region17: #{_dconv2d2_forward.1} parent=15 // pred_check
        %p132 = pneg %p47
      $region18: #{_dconv2d2_forward.1} parent=15 // pred_check_branch
        %134 = sbr.rel (%p132) target = $region20
      $region19: #{_dconv2d2_forward.1} parent=15 // pred_region
        %p135 = scmp.lt.s32.totalorder %s15, 2
        %s136 = scalar_select %p135, %s15, 2
        %s137 = smul.addr %s136, 4
        %s138 = scalar_lea.vmem %s0, %s137
      $region20: #{_dconv2d2_forward.1} parent=15 // pred_fallthru
        _
      // Predicated region
      $region21: #{_dconv2d2_forward.1} parent=15 // pred_check
        %p139 = pneg %p77
      $region22: #{_dconv2d2_forward.1} parent=15 // pred_check_branch
        %141 = sbr.rel (%p139) target = $region24
      $region23: #{_dconv2d2_forward.1} parent=15 // pred_region
        %s142 = smul.u32 2, %s17
        %p143 = scmp.lt.s32.totalorder %s15, 2
        %s144 = scalar_select %p143, %s15, 2
        %p145 = scmp.lt.s32.totalorder %s16, 1
        %s146 = scalar_select %p145, %s16, 1
        %p147 = scmp.lt.s32.totalorder %s142, 1
        %s148 = scalar_select %p147, %s142, 1
        %s149 = smul.addr %s146, 18
        %s150 = sadd.s32 %s148, %s149
        %s151 = smul.addr %s144, 36
        %s152 = sadd.s32 %s150, %s151
        %s153 = smul.addr %s152, 4
        %s154 = scalar_lea.vmem %s1, %s153
        %s155 = smul.u32 2, %s17
      $region24: #{_dconv2d2_forward.1} parent=15 // pred_fallthru
        _
    $region16: #{_dconv2d2_forward.1} parent=5 // pred_fallthru
      _
    %p156 = scmp.le.s32.totalorder 1, %s8
    %p157 = scmp.lt.s32.totalorder %s8, 7
    %p158 = pnand %p156, %p157
    %p159 = pneg %p158
    // Predicated region
    $region25: #{_dconv2d2_forward.1} parent=5 // pred_check
      _
    $region26: #{_dconv2d2_forward.1} parent=5 // pred_check_branch
      %161 = sbr.rel (%p158) target = $region28
    $region27: #{_dconv2d2_forward.1} parent=5 // pred_region
      %s162 = ssub.s32 %s8, 1
      %p163 = scmp.lt.s32.totalorder %s18, 2
      %s164 = scalar_select %p163, %s18, 2
      %s165 = smul.addr %s164, 4
      %s166 = scalar_lea.vmem %s0, %s165
      %p167 = pneg %p53
      %p168 = pneg %p50
      %s169 = smul.u32 2, %s20
      %p170 = scmp.lt.s32.totalorder %s18, 2
      %s171 = scalar_select %p170, %s18, 2
      %p172 = scmp.lt.s32.totalorder %s19, 1
      %s173 = scalar_select %p172, %s19, 1
      %p174 = scmp.lt.s32.totalorder %s169, 1
      %s175 = scalar_select %p174, %s169, 1
      %s176 = smul.addr %s173, 18
      %s177 = sadd.s32 %s175, %s176
      %s178 = smul.addr %s171, 36
      %s179 = sadd.s32 %s177, %s178
      %s180 = smul.addr %s179, 4
      %s181 = scalar_lea.vmem %s1, %s180
      %p182 = pneg %p83
      %p183 = pneg %p80
      %p184 = pneg %p113
      %p185 = pneg %p110
      %s186 = smul.u32 2, %s20
      %p187 = scmp.lt.s32.totalorder %s18, 2
      %s188 = scalar_select %p187, %s18, 2
      %p189 = scmp.lt.s32.totalorder %s19, 1
      %s190 = scalar_select %p189, %s19, 1
      %p191 = scmp.lt.s32.totalorder %s186, 1
      %s192 = scalar_select %p191, %s186, 1
      %s193 = smul.addr %s190, 2
      %s194 = sadd.s32 %s192, %s193
      %s195 = smul.addr %s188, 4
      %s196 = sadd.s32 %s194, %s195
      %s197 = smul.addr %s196, 8
      %s198 = scalar_lea.vmem %s2, %s197
      %p199 = scmp.lt.s32.totalorder %s18, 2
      %s200 = scalar_select %p199, %s18, 2
      %s201 = smul.addr %s200, 4
      %s202 = scalar_lea.vmem %s0, %s201
      %s203 = smul.u32 2, %s20
      %p204 = scmp.lt.s32.totalorder %s18, 2
      %s205 = scalar_select %p204, %s18, 2
      %p206 = scmp.lt.s32.totalorder %s19, 1
      %s207 = scalar_select %p206, %s19, 1
      %p208 = scmp.lt.s32.totalorder %s203, 1
      %s209 = scalar_select %p208, %s203, 1
      %s210 = smul.addr %s207, 18
      %s211 = sadd.s32 %s209, %s210
      %s212 = smul.addr %s205, 36
      %s213 = sadd.s32 %s211, %s212
      %s214 = smul.addr %s213, 4
      %s215 = scalar_lea.vmem %s1, %s214
      %s216 = smul.u32 2, %s20
      %s217 = smul.u32 2, %s20
      %p218 = scmp.lt.s32.totalorder %s18, 2
      %s219 = scalar_select %p218, %s18, 2
      %p220 = scmp.lt.s32.totalorder %s19, 1
      %s221 = scalar_select %p220, %s19, 1
      %p222 = scmp.lt.s32.totalorder %s217, 1
      %s223 = scalar_select %p222, %s217, 1
      %s224 = smul.addr %s221, 2
      %s225 = sadd.s32 %s223, %s224
      %s226 = smul.addr %s219, 4
      %s227 = sadd.s32 %s225, %s226
      %s228 = smul.addr %s227, 8
      %s229 = scalar_lea.vmem %s2, %s228
      %s230 = smul.u32 2, %s20
      %v232 = vld [vmem:[%s202] sm:$0xf]
      %v233 = vld [vmem:[%s215] sm:$0xff]
      %v234 = vld [vmem:[%s215 + $0x8] sm:$0xff]
      %v235 = vld [vmem:[%s215 + $0x10] sm:$0xff]
      %v236 = vld [vmem:[%s215 + $0x18] sm:$0xff]
      %v237 = vld [vmem:[%s215 + $0x20] sm:$0xff]
      %v238 = vld [vmem:[%s215 + $0x28] sm:$0xff]
      %v239 = vld [vmem:[%s215 + $0x30] sm:$0xff]
      %v240 = vld [vmem:[%s215 + $0x38] sm:$0xff]
      %v241 = vld [vmem:[%s215 + $0x40] sm:$0xff]
      %v251 = vunpack.c.l.b16 %v233
      %v252 = vunpack.c.h.b16 %v233
      %v253 = vunpack.c.l.b16 %v234
      %v254 = vunpack.c.h.b16 %v234
      %v255 = vunpack.c.l.b16 %v235
      %v256 = vunpack.c.h.b16 %v235
      %v257 = vunpack.c.l.b16 %v236
      %v258 = vunpack.c.h.b16 %v236
      %v259 = vunpack.c.l.b16 %v237
      %v260 = vunpack.c.h.b16 %v237
      %v261 = vunpack.c.l.b16 %v238
      %v262 = vunpack.c.h.b16 %v238
      %v263 = vunpack.c.l.b16 %v239
      %v264 = vunpack.c.h.b16 %v239
      %v265 = vunpack.c.l.b16 %v240
      %v266 = vunpack.c.h.b16 %v240
      %v267 = vunpack.c.l.b16 %v241
      %v268 = vunpack.c.h.b16 %v241
      %v269 = vpack.c.b16 %v253, %v251
      %v270 = vpack.c.b16 %v254, %v252
      %v271 = vpack.c.b16 %v257, %v255
      %v272 = vpack.c.b16 %v258, %v256
      %v273 = vpack.c.b16 %v261, %v259
      %v274 = vpack.c.b16 %v262, %v260
      %v275 = vpack.c.b16 %v265, %v263
      %v276 = vpack.c.b16 %v266, %v264
      %v277 = vpack.c.b16 %v267, %v267
      %v278 = vpack.c.b16 %v268, %v268
      %vm287 = vcmask 588800
      %v289 = vsel %vm287, %v232, 0
      %vm291 = vcmask 1043456
      %v293 = vsel %vm291, %v277, 0
      %v296 = vsel %vm291, %v278, 0
      %298 = vmatpush.bf16.msra.mxu0 0
      %299 = vmatpush.bf16.msra.mxu0 0
      %300 = vmatpush.bf16.msra.mxu0 0
      %301 = vmatpush.bf16.msra.mxu0 %v293
      %302 = vmatpush.bf16.msra.mxu0 %v275
      %303 = vmatpush.bf16.msra.mxu0 %v273
      %304 = vmatpush.bf16.msra.mxu0 %v271
      %305 = vmatpush.bf16.msra.mxu0 %v269
      %306 = vmatmul.bf16.gmra.mxu0 %v289
      %v307 = vpop.f32.mrf.mxu0
      %v308 = vadd.f32 0.0, %v307
      %v309 = vpop.f32.mrf.mxu0
      %310 = vdwg.mxu0
      %311 = vmatpush.bf16.msra.mxu0 0
      %312 = vmatpush.bf16.msra.mxu0 0
      %313 = vmatpush.bf16.msra.mxu0 0
      %314 = vmatpush.bf16.msra.mxu0 %v296
      %315 = vmatpush.bf16.msra.mxu0 %v276
      %316 = vmatpush.bf16.msra.mxu0 %v274
      %317 = vmatpush.bf16.msra.mxu0 %v272
      %318 = vmatpush.bf16.msra.mxu0 %v270
      %319 = vmatmul.bf16.gmra.mxu0 %v289
      %v320 = vpop.f32.mrf.mxu0
      %v321 = vadd.f32 0.0, %v320
      %v322 = vpop.f32.mrf.mxu0
      %323 = vdwg.mxu0
      %324 = vst [vmem:[%s229] sm:$0xff] %v308
      %325 = vst [vmem:[%s229 + $0x8] sm:$0xff] %v321
      %s326 = smul.u32 2, %s20
      %p327 = scmp.lt.s32.totalorder %s18, 2
      %s328 = scalar_select %p327, %s18, 2
      %p329 = scmp.lt.s32.totalorder %s19, 1
      %s330 = scalar_select %p329, %s19, 1
      %p331 = scmp.lt.s32.totalorder %s326, 1
      %s332 = scalar_select %p331, %s326, 1
      %s333 = smul.addr %s330, 2
      %s334 = sadd.s32 %s332, %s333
      %s335 = smul.addr %s328, 4
      %s336 = sadd.s32 %s334, %s335
      %s337 = smul.addr %s336, 8
      %s338 = scalar_lea.vmem %s2, %s337
      // Predicated region
      $region29: #{_dconv2d2_forward.1} parent=27 // pred_check
        %p339 = pneg %p110
      $region30: #{_dconv2d2_forward.1} parent=27 // pred_check_branch
        %341 = sbr.rel (%p339) target = $region32
      $region31: #{_dconv2d2_forward.1} parent=27 // pred_region
        %s342 = smul.u32 2, %s20
      $region32: #{_dconv2d2_forward.1} parent=27 // pred_fallthru
        _
    $region28: #{_dconv2d2_forward.1} parent=5 // pred_fallthru
      _
    %p343 = scmp.le.s32.totalorder 2, %s8
    // Predicated region
    $region33: #{_dconv2d2_forward.1} parent=5 // pred_check
      %p344 = pneg %p343
    $region34: #{_dconv2d2_forward.1} parent=5 // pred_check_branch
      %346 = sbr.rel (%p344) target = $region36
    $region35: #{_dconv2d2_forward.1} parent=5 // pred_region
      %s347 = ssub.s32 %s8, 2
      // Predicated region
      $region37: #{_dconv2d2_forward.1} parent=35 // pred_check
        %p348 = pneg %p116
      $region38: #{_dconv2d2_forward.1} parent=35 // pred_check_branch
        %350 = sbr.rel (%p348) target = $region40
      $region39: #{_dconv2d2_forward.1} parent=35 // pred_region
        %s351 = smul.u32 2, %s23
        %p352 = scmp.lt.s32.totalorder %s21, 2
        %s353 = scalar_select %p352, %s21, 2
        %p354 = scmp.lt.s32.totalorder %s22, 1
        %s355 = scalar_select %p354, %s22, 1
        %p356 = scmp.lt.s32.totalorder %s351, 1
        %s357 = scalar_select %p356, %s351, 1
        %s358 = smul.addr %s355, 2
        %s359 = sadd.s32 %s357, %s358
        %s360 = smul.addr %s353, 4
        %s361 = sadd.s32 %s359, %s360
        %s362 = smul.addr %s361, 8
        %s363 = scalar_lea.vmem %s2, %s362
      $region40: #{_dconv2d2_forward.1} parent=35 // pred_fallthru
        _
    $region36: #{_dconv2d2_forward.1} parent=5 // pred_fallthru
      _
  $region6: #{_dconv2d2_forward.1} parent=0 // loop_footer
    %s12 = sadd.s32 1, %s8
  $region7: #{_dconv2d2_forward.1} parent=0 // loop_footer_branch
    %7 = sbr.rel target = $region3
  $region8: #{_dconv2d2_forward.1} parent=0 // loop_exit
    _

</llo_original>
